<compile_context>
chip_gen: v6e
topology: v6e:2x2x1
jax: 0.10.0
libtpu: 0.0.40
codegen_flags: <defaults>
</compile_context>

<pallas_src>
import functools

import jax
import jax.numpy as jnp
from jax.experimental import pallas as pl
from jax.experimental.pallas import tpu as pltpu


def _round_up(x, m):
    return ((x + m - 1) // m) * m


# ---------------------------------------------------------------------------
# Kernel
# ---------------------------------------------------------------------------
def highway_kernel(x_ref, wf_ref, bf_ref, wht_ref, bht_ref, wl_ref, bl_ref,
                   o_ref, *, nb_layers, hidden):
    """One batch tile: first Linear -> highway stack -> last Linear.

    `hidden` is the 128-padded hidden size, so slicing the fused H|T result at
    column `hidden` is a lane-aligned (zero-cost) view.
    """
    # first_layer: Linear(input -> hidden); bf16 operands, f32 accumulate.
    out = jnp.dot(x_ref[...].astype(jnp.bfloat16), wf_ref[...],
                  preferred_element_type=jnp.float32) + bf_ref[...]

    def one_layer(out, w_ht, b_ht):
        ht = jnp.dot(out.astype(jnp.bfloat16), w_ht,
                     preferred_element_type=jnp.float32) + b_ht
        h = jnp.maximum(ht[:, :hidden], 0.0)       # f = ReLU   (H half)
        t = jax.nn.sigmoid(ht[:, hidden:])         # gate       (T half)
        return out + t * (h - out)                 # == h*t + out*(1-t)

    if nb_layers <= 4:
        # Small stacks: unroll at trace time (max scheduling freedom).
        for l in range(nb_layers):
            out = one_layer(out, wht_ref[l], bht_ref[l])
    else:
        # Deep stacks: fori_loop bounds live ranges / compile time; dynamic
        # leading-axis indexing into the fused VMEM weight stack.
        def body(l, carry):
            return one_layer(carry, wht_ref[l], bht_ref[l])
        out = jax.lax.fori_loop(0, nb_layers, body, out)

    # last_layer: Linear(hidden -> padded classes); lane-dense store.
    o_ref[...] = (jnp.dot(out.astype(jnp.bfloat16), wl_ref[...],
                          preferred_element_type=jnp.float32) + bl_ref[...]
                  ).astype(o_ref.dtype)


# ---------------------------------------------------------------------------
# Generation / VMEM helpers
# ---------------------------------------------------------------------------
def _tpu_info():
    """Returns (physical VMEM bytes per TensorCore, #TensorCores for the grid)."""
    vmem_cap = 64 << 20  # conservative default (v7x-sized) if the query fails
    try:
        info = pltpu.get_tpu_info()
        vmem_cap = int(getattr(info, "vmem_capacity_bytes", vmem_cap))
    except Exception:
        pass
    # Heuristic: v7x exposes 64 MiB VMEM per TC and has 2 TCs per chip;
    # v5e/v6e expose 128 MiB and have a single TC.
    num_tc = 2 if vmem_cap <= (64 << 20) else 1
    return vmem_cap, num_tc


def _weight_bytes(in_pad, h_pad, c_pad, nb_layers):
    w = (in_pad * h_pad + nb_layers * h_pad * 2 * h_pad + h_pad * c_pad) * 2  # bf16
    b = (h_pad + nb_layers * 2 * h_pad + c_pad) * 4                            # f32
    return w + b


def _per_tile_bytes(tile_b, in_pad, h_pad, c_pad):
    # Streamed tiles (x in, out back) are double-buffered by the pipeline.
    stream = 2 * tile_b * in_pad * 4 + 2 * tile_b * c_pad * 4
    # In-kernel intermediates: out [B,Hp] f32, ht [B,2Hp] f32, last-dot result
    # [B,Cp] f32, plus bf16 staging copies for the MXU operands.
    interm = tile_b * (4 * h_pad + c_pad) * 4 + tile_b * (in_pad + 3 * h_pad) * 2
    return stream + interm


def _choose_tile_b(batch, in_pad, h_pad, c_pad, nb_layers, vmem_cap, num_tc,
                   single_buffer_weights):
    b8 = _round_up(max(batch, 1), 8)
    if num_tc >= 2 and b8 >= 16:
        # >=2 grid steps so both v7x TensorCores get a share of the batch.
        desired = _round_up(pl.cdiv(b8, 2), 8)
    else:
        # Single TensorCore: the grid is a serial loop -> one big tile.
        desired = b8
    desired = min(desired, 2048)  # amortizes ~600-cycle per-step overhead

    wbuf = 1 if single_buffer_weights else 2
    budget = int(vmem_cap * 0.75) - wbuf * _weight_bytes(in_pad, h_pad, c_pad,
                                                         nb_layers)
    tb = max(8, desired)
    while tb > 8 and _per_tile_bytes(tb, in_pad, h_pad, c_pad) > budget:
        tb = _round_up(tb // 2, 8)
    return max(8, tb)


# ---------------------------------------------------------------------------
# pallas_call builder
# ---------------------------------------------------------------------------
def _pallas_highway(xp, wf_b, bf_f, wht, bht, wl_b, bl_f, *, nb_layers, h_pad,
                    tile_b, vmem_limit, single_buffer_weights):
    Bp, in_pad = xp.shape
    L = wht.shape[0]
    c_pad = wl_b.shape[1]
    grid = (Bp // tile_b,)

    def w_spec(shape):
        # Grid-invariant operands: DMA'd once; single-buffer to reclaim VMEM.
        if len(shape) == 2:
            idx = lambda i: (0, 0)
        else:
            idx = lambda i: (0, 0, 0)
        if single_buffer_weights:
            return pl.BlockSpec(shape, idx, pipeline_mode=pl.Buffered(1))
        return pl.BlockSpec(shape, idx)

    kernel = functools.partial(highway_kernel, nb_layers=nb_layers,
                               hidden=h_pad)

    return pl.pallas_call(
        kernel,
        out_shape=jax.ShapeDtypeStruct((Bp, c_pad), jnp.float32),
        grid_spec=pltpu.PrefetchScalarGridSpec(
            num_scalar_prefetch=0,
            grid=grid,
            in_specs=[
                pl.BlockSpec((tile_b, in_pad), lambda i: (i, 0)),  # x tile
                w_spec((in_pad, h_pad)),                           # W_first (bf16)
                w_spec((1, h_pad)),                                # b_first (f32)
                w_spec((L, h_pad, 2 * h_pad)),                     # W_H|W_T fused
                w_spec((L, 1, 2 * h_pad)),                         # b_H|b_T fused
                w_spec((h_pad, c_pad)),                            # W_last (padded)
                w_spec((1, c_pad)),                                # b_last (padded)
            ],
            out_specs=pl.BlockSpec((tile_b, c_pad), lambda i: (i, 0)),
        ),
        compiler_params=pltpu.CompilerParams(
            dimension_semantics=("parallel",),
            vmem_limit_bytes=vmem_limit),
    )(xp, wf_b, bf_f, wht, bht, wl_b, bl_f)


# ---------------------------------------------------------------------------
# Wrapper
# ---------------------------------------------------------------------------
def highway_forward(x, params, *, nb_layers, tile_b=None):
    """x: [B, input_size] f32. params: f32 weights laid out [in, out]."""
    wf, bf, wh, bh, wt, bt, wl, bl = params
    B, IN = x.shape
    H = wf.shape[1]
    C = wl.shape[1]
    L = wh.shape[0]
    assert L == nb_layers

    vmem_cap, num_tc = _tpu_info()

    # --- pad every feature dim to a 128-lane multiple (zero pad == exact) ---
    in_pad = _round_up(IN, 128)
    h_pad = _round_up(H, 128)
    c_pad = _round_up(C, 128)

    def pad2(a, rows, cols):
        return jnp.pad(a, ((0, rows - a.shape[0]), (0, cols - a.shape[1])))

    wf_b = pad2(wf, in_pad, h_pad).astype(jnp.bfloat16)
    bf_f = pad2(bf, 1, h_pad).astype(jnp.float32)

    # Fuse per-layer H/T projections along the output dim: one dot per layer.
    wh_p = jnp.pad(wh, ((0, 0), (0, h_pad - H), (0, h_pad - H)))
    wt_p = jnp.pad(wt, ((0, 0), (0, h_pad - H), (0, h_pad - H)))
    bh_p = jnp.pad(bh, ((0, 0), (0, 0), (0, h_pad - H)))
    bt_p = jnp.pad(bt, ((0, 0), (0, 0), (0, h_pad - H)))
    wht = jnp.concatenate([wh_p, wt_p], axis=-1).astype(jnp.bfloat16)  # [L,Hp,2Hp]
    bht = jnp.concatenate([bh_p, bt_p], axis=-1).astype(jnp.float32)   # [L,1,2Hp]

    wl_b = pad2(wl, h_pad, c_pad).astype(jnp.bfloat16)
    bl_f = pad2(bl, 1, c_pad).astype(jnp.float32)

    weight_bytes = _weight_bytes(in_pad, h_pad, c_pad, L)

    # --- batch tiling (generation aware) -------------------------------------
    if tile_b is None:
        tile_b = _choose_tile_b(B, in_pad, h_pad, c_pad, L, vmem_cap, num_tc,
                                single_buffer_weights=True)
    tile_b = max(8, _round_up(tile_b, 8))
    Bp = pl.cdiv(B, tile_b) * tile_b
    xp = jnp.pad(x.astype(jnp.float32), ((0, Bp - B), (0, in_pad - IN)))

    def vmem_limit_for(single_buffer):
        wbuf = 1 if single_buffer else 2
        need = (wbuf * weight_bytes
                + _per_tile_bytes(tile_b, in_pad, h_pad, c_pad)
                + (4 << 20))  # compiler headroom
        return int(min(max(need, 16 << 20), int(vmem_cap * 0.9)))

    call = functools.partial(
        _pallas_highway, xp, wf_b, bf_f, wht, bht, wl_b, bl_f,
        nb_layers=nb_layers, h_pad=h_pad, tile_b=tile_b)

    try:
        out_p = call(vmem_limit=vmem_limit_for(True),
                     single_buffer_weights=True)
    except Exception:
        # pipeline_mode=pl.Buffered(1) unsupported in this build -> default
        # double-buffered weight specs (grid-invariant, still DMA'd once).
        out_p = call(vmem_limit=vmem_limit_for(False),
                     single_buffer_weights=False)

    return out_p[:B, :C]


# ---------------------------------------------------------------------------
# Parameters + references
# ---------------------------------------------------------------------------
def make_params(key, input_size, hidden_size, nb_layers, nb_classes, bias_T=-3.0):
    """Deterministic synthetic parameters (PyTorch-Linear-like uniform init)."""
    ks = jax.random.split(key, 3)

    def lin(k, fan_in, fan_out):
        bound = 1.0 / jnp.sqrt(fan_in)
        kw, kb = jax.random.split(k)
        w = jax.random.uniform(kw, (fan_in, fan_out), jnp.float32, -bound, bound)
        b = jax.random.uniform(kb, (1, fan_out), jnp.float32, -bound, bound)
        return w, b

    wf, bf = lin(ks[0], input_size, hidden_size)
    wl, bl = lin(ks[1], hidden_size, nb_classes)

    wh_list, bh_list, wt_list, bt_list = [], [], [], []
    layer_keys = jax.random.split(ks[2], nb_layers)
    for lk in layer_keys:
        lk_h, lk_t = jax.random.split(lk)
        w_h, b_h = lin(lk_h, hidden_size, hidden_size)
        w_t, _ = lin(lk_t, hidden_size, hidden_size)
        b_t = jnp.full((1, hidden_size), bias_T, jnp.float32)  # T.bias.fill_(bias_T)
        wh_list.append(w_h); bh_list.append(b_h)
        wt_list.append(w_t); bt_list.append(b_t)

    wh = jnp.stack(wh_list)                 # [L, H, H]
    bh = jnp.stack(bh_list)                 # [L, 1, H]
    wt = jnp.stack(wt_list)                 # [L, H, H]
    bt = jnp.stack(bt_list)                 # [L, 1, H]
    return wf, bf, wh, bh, wt, bt, wl, bl


def highway_ref_f32(x, params, nb_layers):
    """Plain-JAX f32 reference matching the PyTorch forward semantics."""
    wf, bf, wh, bh, wt, bt, wl, bl = params
    out = x @ wf + bf
    for l in range(nb_layers):
        h = jnp.maximum(out @ wh[l] + bh[l], 0.0)
        t = jax.nn.sigmoid(out @ wt[l] + bt[l])
        out = h * t + out * (1.0 - t)
    return out @ wl + bl


def highway_ref_bf16(x, params, nb_layers):
    """Reference mirroring the kernel's precision (bf16 operands, f32 accum)."""
    wf, bf, wh, bh, wt, bt, wl, bl = params

    def mm(a, w):
        return jax.lax.dot(a.astype(jnp.bfloat16), w.astype(jnp.bfloat16),
                           preferred_element_type=jnp.float32)

    out = mm(x, wf) + bf
    for l in range(nb_layers):
        h = jnp.maximum(mm(out, wh[l]) + bh[l], 0.0)
        t = jax.nn.sigmoid(mm(out, wt[l]) + bt[l])
        out = out + t * (h - out)
    return mm(out, wl) + bl


# ---------------------------------------------------------------------------
# Test
# ---------------------------------------------------------------------------
def _check(tag, x, params, nb_layers, tile_b=None):
    out = highway_forward(x, params, nb_layers=nb_layers, tile_b=tile_b)
    out = jax.block_until_ready(out)
    assert out.shape == (x.shape[0], params[6].shape[1])

    ref16 = highway_ref_bf16(x, params, nb_layers)   # same precision as kernel
    ref32 = highway_ref_f32(x, params, nb_layers)    # original f32 semantics
    assert jnp.allclose(out, ref16, atol=5e-3, rtol=5e-3), f"{tag}: vs bf16 ref"
    assert jnp.allclose(out, ref32, atol=5e-2, rtol=5e-2), f"{tag}: vs f32 ref"


if __name__ == "__main__":
    key = jax.random.PRNGKey(0)
    k1x, k1p, k2x, k2p = jax.random.split(key, 4)

    # Test 1: small config, unrolled layer path, auto tile selection.
    input_size, hidden_size, nb_layers, nb_classes, batch = 32, 32, 3, 8, 16
    x1 = jax.random.normal(k1x, (batch, input_size), jnp.float32)
    p1 = make_params(k1p, input_size, hidden_size, nb_layers, nb_classes,
                     bias_T=-3.0)
    _check("test1", x1, p1, nb_layers)

    # Test 2: deeper stack (fori_loop path), ragged batch, multi-step grid.
    input_size, hidden_size, nb_layers, nb_classes, batch = 48, 64, 6, 10, 20
    x2 = jax.random.normal(k2x, (batch, input_size), jnp.float32)
    p2 = make_params(k2p, input_size, hidden_size, nb_layers, nb_classes,
                     bias_T=-3.0)
    _check("test2", x2, p2, nb_layers, tile_b=8)

    print("KERNEL_OK")
</pallas_src>

<mosaic_0001>
module attributes {stable_mosaic.version = 11 : i64} {
  func.func @highway_kernel(%arg0: i32, %arg1: memref<8x128xf32, #tpu.memory_space<vmem>>, %arg2: memref<128x128xbf16, #tpu.memory_space<vmem>>, %arg3: memref<1x128xf32, #tpu.memory_space<vmem>>, %arg4: memref<3x128x256xbf16, #tpu.memory_space<vmem>>, %arg5: memref<3x1x256xf32, #tpu.memory_space<vmem>>, %arg6: memref<128x128xbf16, #tpu.memory_space<vmem>>, %arg7: memref<1x128xf32, #tpu.memory_space<vmem>>, %arg8: memref<8x128xf32, #tpu.memory_space<vmem>>) attributes {dimension_semantics = [#tpu.dimension_semantics<parallel>], iteration_bounds = array<i64: 2>, scalar_prefetch = 0 : i64, scratch_operands = 0 : i64, tpu.core_type = #tpu.core_type<tc>, window_params = [{transform_indices = @transform_0, window_bounds = array<i64: 8, 128>}, {pipeline_mode = #tpu.pipeline_mode<synchronous>, transform_indices = @transform_1, window_bounds = array<i64: 128, 128>}, {pipeline_mode = #tpu.pipeline_mode<synchronous>, transform_indices = @transform_2, window_bounds = array<i64: 1, 128>}, {pipeline_mode = #tpu.pipeline_mode<synchronous>, transform_indices = @transform_3, window_bounds = array<i64: 3, 128, 256>}, {pipeline_mode = #tpu.pipeline_mode<synchronous>, transform_indices = @transform_4, window_bounds = array<i64: 3, 1, 256>}, {pipeline_mode = #tpu.pipeline_mode<synchronous>, transform_indices = @transform_5, window_bounds = array<i64: 128, 128>}, {pipeline_mode = #tpu.pipeline_mode<synchronous>, transform_indices = @transform_6, window_bounds = array<i64: 1, 128>}, {transform_indices = @transform_7, window_bounds = array<i64: 8, 128>}]} {
    %c0 = arith.constant 0 : index
    %c0_0 = arith.constant 0 : index
    %0 = vector.load %arg1[%c0, %c0_0] : memref<8x128xf32, #tpu.memory_space<vmem>>, vector<8x128xf32>
    %1 = arith.truncf %0 : vector<8x128xf32> to vector<8x128xbf16>
    %c0_1 = arith.constant 0 : index
    %c0_2 = arith.constant 0 : index
    %2 = vector.load %arg2[%c0_1, %c0_2] : memref<128x128xbf16, #tpu.memory_space<vmem>>, vector<128x128xbf16>
    %cst = arith.constant dense<0.000000e+00> : vector<8x128xf32>
    %3 = tpu.matmul %1, %2, %cst {dimension_numbers = #tpu.dot_dimension_numbers<[1], [0], [0], [1], [0, 0, 1, 1], [], []>} : vector<8x128xbf16>, vector<128x128xbf16>, vector<8x128xf32> -> vector<8x128xf32>
    %c0_3 = arith.constant 0 : index
    %c0_4 = arith.constant 0 : index
    %4 = vector.load %arg3[%c0_3, %c0_4] : memref<1x128xf32, #tpu.memory_space<vmem>>, vector<1x128xf32>
    %5 = vector.broadcast %4 : vector<1x128xf32> to vector<8x128xf32>
    %6 = arith.addf %3, %5 : vector<8x128xf32>
    %c0_5 = arith.constant 0 : index
    %c0_6 = arith.constant 0 : index
    %c0_7 = arith.constant 0 : index
    %7 = vector.load %arg4[%c0_5, %c0_6, %c0_7] : memref<3x128x256xbf16, #tpu.memory_space<vmem>>, vector<1x128x256xbf16>
    %8 = vector.shape_cast %7 : vector<1x128x256xbf16> to vector<128x256xbf16>
    %c0_8 = arith.constant 0 : index
    %c0_9 = arith.constant 0 : index
    %c0_10 = arith.constant 0 : index
    %9 = vector.load %arg5[%c0_8, %c0_9, %c0_10] : memref<3x1x256xf32, #tpu.memory_space<vmem>>, vector<1x1x256xf32>
    %10 = vector.shape_cast %9 : vector<1x1x256xf32> to vector<1x256xf32>
    %11 = arith.truncf %6 : vector<8x128xf32> to vector<8x128xbf16>
    %cst_11 = arith.constant dense<0.000000e+00> : vector<8x256xf32>
    %12 = tpu.matmul %11, %8, %cst_11 {dimension_numbers = #tpu.dot_dimension_numbers<[1], [0], [0], [1], [0, 0, 1, 1], [], []>} : vector<8x128xbf16>, vector<128x256xbf16>, vector<8x256xf32> -> vector<8x256xf32>
    %13 = vector.broadcast %10 : vector<1x256xf32> to vector<8x256xf32>
    %14 = arith.addf %12, %13 : vector<8x256xf32>
    %15 = vector.extract_strided_slice %14 {offsets = [0, 0], sizes = [8, 128], strides = [1, 1]} : vector<8x256xf32> to vector<8x128xf32>
    %cst_12 = arith.constant 0.000000e+00 : f32
    %16 = vector.broadcast %cst_12 : f32 to vector<8x128xf32>
    %17 = arith.maximumf %15, %16 : vector<8x128xf32>
    %18 = vector.extract_strided_slice %14 {offsets = [0, 128], sizes = [8, 128], strides = [1, 1]} : vector<8x256xf32> to vector<8x128xf32>
    %19 = arith.negf %18 : vector<8x128xf32>
    %20 = math.exp %19 : vector<8x128xf32>
    %cst_13 = arith.constant 1.000000e+00 : f32
    %21 = vector.broadcast %cst_13 : f32 to vector<8x128xf32>
    %22 = arith.addf %21, %20 : vector<8x128xf32>
    %23 = arith.divf %21, %22 : vector<8x128xf32>
    %24 = arith.subf %17, %6 : vector<8x128xf32>
    %25 = arith.mulf %23, %24 : vector<8x128xf32>
    %26 = arith.addf %6, %25 : vector<8x128xf32>
    %c1 = arith.constant 1 : index
    %c0_14 = arith.constant 0 : index
    %c0_15 = arith.constant 0 : index
    %27 = vector.load %arg4[%c1, %c0_14, %c0_15] : memref<3x128x256xbf16, #tpu.memory_space<vmem>>, vector<1x128x256xbf16>
    %28 = vector.shape_cast %27 : vector<1x128x256xbf16> to vector<128x256xbf16>
    %c1_16 = arith.constant 1 : index
    %c0_17 = arith.constant 0 : index
    %c0_18 = arith.constant 0 : index
    %29 = vector.load %arg5[%c1_16, %c0_17, %c0_18] : memref<3x1x256xf32, #tpu.memory_space<vmem>>, vector<1x1x256xf32>
    %30 = vector.shape_cast %29 : vector<1x1x256xf32> to vector<1x256xf32>
    %31 = arith.truncf %26 : vector<8x128xf32> to vector<8x128xbf16>
    %cst_19 = arith.constant dense<0.000000e+00> : vector<8x256xf32>
    %32 = tpu.matmul %31, %28, %cst_19 {dimension_numbers = #tpu.dot_dimension_numbers<[1], [0], [0], [1], [0, 0, 1, 1], [], []>} : vector<8x128xbf16>, vector<128x256xbf16>, vector<8x256xf32> -> vector<8x256xf32>
    %33 = vector.broadcast %30 : vector<1x256xf32> to vector<8x256xf32>
    %34 = arith.addf %32, %33 : vector<8x256xf32>
    %35 = vector.extract_strided_slice %34 {offsets = [0, 0], sizes = [8, 128], strides = [1, 1]} : vector<8x256xf32> to vector<8x128xf32>
    %cst_20 = arith.constant 0.000000e+00 : f32
    %36 = vector.broadcast %cst_20 : f32 to vector<8x128xf32>
    %37 = arith.maximumf %35, %36 : vector<8x128xf32>
    %38 = vector.extract_strided_slice %34 {offsets = [0, 128], sizes = [8, 128], strides = [1, 1]} : vector<8x256xf32> to vector<8x128xf32>
    %39 = arith.negf %38 : vector<8x128xf32>
    %40 = math.exp %39 : vector<8x128xf32>
    %cst_21 = arith.constant 1.000000e+00 : f32
    %41 = vector.broadcast %cst_21 : f32 to vector<8x128xf32>
    %42 = arith.addf %41, %40 : vector<8x128xf32>
    %43 = arith.divf %41, %42 : vector<8x128xf32>
    %44 = arith.subf %37, %26 : vector<8x128xf32>
    %45 = arith.mulf %43, %44 : vector<8x128xf32>
    %46 = arith.addf %26, %45 : vector<8x128xf32>
    %c2 = arith.constant 2 : index
    %c0_22 = arith.constant 0 : index
    %c0_23 = arith.constant 0 : index
    %47 = vector.load %arg4[%c2, %c0_22, %c0_23] : memref<3x128x256xbf16, #tpu.memory_space<vmem>>, vector<1x128x256xbf16>
    %48 = vector.shape_cast %47 : vector<1x128x256xbf16> to vector<128x256xbf16>
    %c2_24 = arith.constant 2 : index
    %c0_25 = arith.constant 0 : index
    %c0_26 = arith.constant 0 : index
    %49 = vector.load %arg5[%c2_24, %c0_25, %c0_26] : memref<3x1x256xf32, #tpu.memory_space<vmem>>, vector<1x1x256xf32>
    %50 = vector.shape_cast %49 : vector<1x1x256xf32> to vector<1x256xf32>
    %51 = arith.truncf %46 : vector<8x128xf32> to vector<8x128xbf16>
    %cst_27 = arith.constant dense<0.000000e+00> : vector<8x256xf32>
    %52 = tpu.matmul %51, %48, %cst_27 {dimension_numbers = #tpu.dot_dimension_numbers<[1], [0], [0], [1], [0, 0, 1, 1], [], []>} : vector<8x128xbf16>, vector<128x256xbf16>, vector<8x256xf32> -> vector<8x256xf32>
    %53 = vector.broadcast %50 : vector<1x256xf32> to vector<8x256xf32>
    %54 = arith.addf %52, %53 : vector<8x256xf32>
    %55 = vector.extract_strided_slice %54 {offsets = [0, 0], sizes = [8, 128], strides = [1, 1]} : vector<8x256xf32> to vector<8x128xf32>
    %cst_28 = arith.constant 0.000000e+00 : f32
    %56 = vector.broadcast %cst_28 : f32 to vector<8x128xf32>
    %57 = arith.maximumf %55, %56 : vector<8x128xf32>
    %58 = vector.extract_strided_slice %54 {offsets = [0, 128], sizes = [8, 128], strides = [1, 1]} : vector<8x256xf32> to vector<8x128xf32>
    %59 = arith.negf %58 : vector<8x128xf32>
    %60 = math.exp %59 : vector<8x128xf32>
    %cst_29 = arith.constant 1.000000e+00 : f32
    %61 = vector.broadcast %cst_29 : f32 to vector<8x128xf32>
    %62 = arith.addf %61, %60 : vector<8x128xf32>
    %63 = arith.divf %61, %62 : vector<8x128xf32>
    %64 = arith.subf %57, %46 : vector<8x128xf32>
    %65 = arith.mulf %63, %64 : vector<8x128xf32>
    %66 = arith.addf %46, %65 : vector<8x128xf32>
    %67 = arith.truncf %66 : vector<8x128xf32> to vector<8x128xbf16>
    %c0_30 = arith.constant 0 : index
    %c0_31 = arith.constant 0 : index
    %68 = vector.load %arg6[%c0_30, %c0_31] : memref<128x128xbf16, #tpu.memory_space<vmem>>, vector<128x128xbf16>
    %cst_32 = arith.constant dense<0.000000e+00> : vector<8x128xf32>
    %69 = tpu.matmul %67, %68, %cst_32 {dimension_numbers = #tpu.dot_dimension_numbers<[1], [0], [0], [1], [0, 0, 1, 1], [], []>} : vector<8x128xbf16>, vector<128x128xbf16>, vector<8x128xf32> -> vector<8x128xf32>
    %c0_33 = arith.constant 0 : index
    %c0_34 = arith.constant 0 : index
    %70 = vector.load %arg7[%c0_33, %c0_34] : memref<1x128xf32, #tpu.memory_space<vmem>>, vector<1x128xf32>
    %71 = vector.broadcast %70 : vector<1x128xf32> to vector<8x128xf32>
    %72 = arith.addf %69, %71 : vector<8x128xf32>
    %c0_35 = arith.constant 0 : index
    %c0_36 = arith.constant 0 : index
    %73 = vector.load %arg8[%c0_35, %c0_36] : memref<8x128xf32, #tpu.memory_space<vmem>>, vector<8x128xf32>
    tpu.vector_store %arg8[%c0_35, %c0_36], %72 {strides = array<i32>} : memref<8x128xf32, #tpu.memory_space<vmem>>, vector<8x128xf32>,
    return
  }
  func.func @transform_0(%arg0: i32) -> (i32, i32) {
    %c0_i32 = arith.constant 0 : i32
    %c0_i32_0 = arith.constant 0 : i32
    return %arg0, %c0_i32 : i32, i32
  }
  func.func @transform_1(%arg0: i32) -> (i32, i32) {
    %c0_i32 = arith.constant 0 : i32
    %c0_i32_0 = arith.constant 0 : i32
    %c0_i32_1 = arith.constant 0 : i32
    return %c0_i32, %c0_i32_0 : i32, i32
  }
  func.func @transform_2(%arg0: i32) -> (i32, i32) {
    %c0_i32 = arith.constant 0 : i32
    %c0_i32_0 = arith.constant 0 : i32
    %c0_i32_1 = arith.constant 0 : i32
    return %c0_i32, %c0_i32_0 : i32, i32
  }
  func.func @transform_3(%arg0: i32) -> (i32, i32, i32) {
    %c0_i32 = arith.constant 0 : i32
    %c0_i32_0 = arith.constant 0 : i32
    %c0_i32_1 = arith.constant 0 : i32
    %c0_i32_2 = arith.constant 0 : i32
    return %c0_i32, %c0_i32_0, %c0_i32_1 : i32, i32, i32
  }
  func.func @transform_4(%arg0: i32) -> (i32, i32, i32) {
    %c0_i32 = arith.constant 0 : i32
    %c0_i32_0 = arith.constant 0 : i32
    %c0_i32_1 = arith.constant 0 : i32
    %c0_i32_2 = arith.constant 0 : i32
    return %c0_i32, %c0_i32_0, %c0_i32_1 : i32, i32, i32
  }
  func.func @transform_5(%arg0: i32) -> (i32, i32) {
    %c0_i32 = arith.constant 0 : i32
    %c0_i32_0 = arith.constant 0 : i32
    %c0_i32_1 = arith.constant 0 : i32
    return %c0_i32, %c0_i32_0 : i32, i32
  }
  func.func @transform_6(%arg0: i32) -> (i32, i32) {
    %c0_i32 = arith.constant 0 : i32
    %c0_i32_0 = arith.constant 0 : i32
    %c0_i32_1 = arith.constant 0 : i32
    return %c0_i32, %c0_i32_0 : i32, i32
  }
  func.func @transform_7(%arg0: i32) -> (i32, i32) {
    %c0_i32 = arith.constant 0 : i32
    %c0_i32_0 = arith.constant 0 : i32
    return %arg0, %c0_i32 : i32, i32
  }
}

module attributes {stable_mosaic.version = 11 : i64} {
  func.func @highway_kernel(%arg0: i32, %arg1: memref<8x128xf32, #tpu.memory_space<vmem>>, %arg2: memref<128x128xbf16, #tpu.memory_space<vmem>>, %arg3: memref<1x128xf32, #tpu.memory_space<vmem>>, %arg4: memref<3x128x256xbf16, #tpu.memory_space<vmem>>, %arg5: memref<3x1x256xf32, #tpu.memory_space<vmem>>, %arg6: memref<128x128xbf16, #tpu.memory_space<vmem>>, %arg7: memref<1x128xf32, #tpu.memory_space<vmem>>, %arg8: memref<8x128xf32, #tpu.memory_space<vmem>>) attributes {dimension_semantics = [#tpu.dimension_semantics<parallel>], iteration_bounds = array<i64: 2>, scalar_prefetch = 0 : i64, scratch_operands = 0 : i64, tpu.core_type = #tpu.core_type<tc>, window_params = [{transform_indices = @transform_0, window_bounds = array<i64: 8, 128>}, {pipeline_mode = #tpu.pipeline_mode<synchronous>, transform_indices = @transform_1, window_bounds = array<i64: 128, 128>}, {pipeline_mode = #tpu.pipeline_mode<synchronous>, transform_indices = @transform_2, window_bounds = array<i64: 1, 128>}, {pipeline_mode = #tpu.pipeline_mode<synchronous>, transform_indices = @transform_3, window_bounds = array<i64: 3, 128, 256>}, {pipeline_mode = #tpu.pipeline_mode<synchronous>, transform_indices = @transform_4, window_bounds = array<i64: 3, 1, 256>}, {pipeline_mode = #tpu.pipeline_mode<synchronous>, transform_indices = @transform_5, window_bounds = array<i64: 128, 128>}, {pipeline_mode = #tpu.pipeline_mode<synchronous>, transform_indices = @transform_6, window_bounds = array<i64: 1, 128>}, {transform_indices = @transform_7, window_bounds = array<i64: 8, 128>}]} {
    %c0 = arith.constant 0 : index
    %c0_0 = arith.constant 0 : index
    %0 = vector.load %arg1[%c0, %c0_0] : memref<8x128xf32, #tpu.memory_space<vmem>>, vector<8x128xf32>
    %1 = arith.truncf %0 : vector<8x128xf32> to vector<8x128xbf16>
    %c0_1 = arith.constant 0 : index
    %c0_2 = arith.constant 0 : index
    %2 = vector.load %arg2[%c0_1, %c0_2] : memref<128x128xbf16, #tpu.memory_space<vmem>>, vector<128x128xbf16>
    %cst = arith.constant dense<0.000000e+00> : vector<8x128xf32>
    %3 = tpu.matmul %1, %2, %cst {dimension_numbers = #tpu.dot_dimension_numbers<[1], [0], [0], [1], [0, 0, 1, 1], [], []>} : vector<8x128xbf16>, vector<128x128xbf16>, vector<8x128xf32> -> vector<8x128xf32>
    %c0_3 = arith.constant 0 : index
    %c0_4 = arith.constant 0 : index
    %4 = vector.load %arg3[%c0_3, %c0_4] : memref<1x128xf32, #tpu.memory_space<vmem>>, vector<1x128xf32>
    %5 = vector.broadcast %4 : vector<1x128xf32> to vector<8x128xf32>
    %6 = arith.addf %3, %5 : vector<8x128xf32>
    %c0_5 = arith.constant 0 : index
    %c0_6 = arith.constant 0 : index
    %c0_7 = arith.constant 0 : index
    %7 = vector.load %arg4[%c0_5, %c0_6, %c0_7] : memref<3x128x256xbf16, #tpu.memory_space<vmem>>, vector<1x128x256xbf16>
    %8 = vector.shape_cast %7 : vector<1x128x256xbf16> to vector<128x256xbf16>
    %c0_8 = arith.constant 0 : index
    %c0_9 = arith.constant 0 : index
    %c0_10 = arith.constant 0 : index
    %9 = vector.load %arg5[%c0_8, %c0_9, %c0_10] : memref<3x1x256xf32, #tpu.memory_space<vmem>>, vector<1x1x256xf32>
    %10 = vector.shape_cast %9 : vector<1x1x256xf32> to vector<1x256xf32>
    %11 = arith.truncf %6 : vector<8x128xf32> to vector<8x128xbf16>
    %cst_11 = arith.constant dense<0.000000e+00> : vector<8x256xf32>
    %12 = tpu.matmul %11, %8, %cst_11 {dimension_numbers = #tpu.dot_dimension_numbers<[1], [0], [0], [1], [0, 0, 1, 1], [], []>} : vector<8x128xbf16>, vector<128x256xbf16>, vector<8x256xf32> -> vector<8x256xf32>
    %13 = vector.broadcast %10 : vector<1x256xf32> to vector<8x256xf32>
    %14 = arith.addf %12, %13 : vector<8x256xf32>
    %15 = vector.extract_strided_slice %14 {offsets = [0, 0], sizes = [8, 128], strides = [1, 1]} : vector<8x256xf32> to vector<8x128xf32>
    %cst_12 = arith.constant 0.000000e+00 : f32
    %16 = vector.broadcast %cst_12 : f32 to vector<8x128xf32>
    %17 = arith.maximumf %15, %16 : vector<8x128xf32>
    %18 = vector.extract_strided_slice %14 {offsets = [0, 128], sizes = [8, 128], strides = [1, 1]} : vector<8x256xf32> to vector<8x128xf32>
    %19 = arith.negf %18 : vector<8x128xf32>
    %20 = math.exp %19 : vector<8x128xf32>
    %cst_13 = arith.constant 1.000000e+00 : f32
    %21 = vector.broadcast %cst_13 : f32 to vector<8x128xf32>
    %22 = arith.addf %21, %20 : vector<8x128xf32>
    %23 = arith.divf %21, %22 : vector<8x128xf32>
    %24 = arith.subf %17, %6 : vector<8x128xf32>
    %25 = arith.mulf %23, %24 : vector<8x128xf32>
    %26 = arith.addf %6, %25 : vector<8x128xf32>
    %c1 = arith.constant 1 : index
    %c0_14 = arith.constant 0 : index
    %c0_15 = arith.constant 0 : index
    %27 = vector.load %arg4[%c1, %c0_14, %c0_15] : memref<3x128x256xbf16, #tpu.memory_space<vmem>>, vector<1x128x256xbf16>
    %28 = vector.shape_cast %27 : vector<1x128x256xbf16> to vector<128x256xbf16>
    %c1_16 = arith.constant 1 : index
    %c0_17 = arith.constant 0 : index
    %c0_18 = arith.constant 0 : index
    %29 = vector.load %arg5[%c1_16, %c0_17, %c0_18] : memref<3x1x256xf32, #tpu.memory_space<vmem>>, vector<1x1x256xf32>
    %30 = vector.shape_cast %29 : vector<1x1x256xf32> to vector<1x256xf32>
    %31 = arith.truncf %26 : vector<8x128xf32> to vector<8x128xbf16>
    %cst_19 = arith.constant dense<0.000000e+00> : vector<8x256xf32>
    %32 = tpu.matmul %31, %28, %cst_19 {dimension_numbers = #tpu.dot_dimension_numbers<[1], [0], [0], [1], [0, 0, 1, 1], [], []>} : vector<8x128xbf16>, vector<128x256xbf16>, vector<8x256xf32> -> vector<8x256xf32>
    %33 = vector.broadcast %30 : vector<1x256xf32> to vector<8x256xf32>
    %34 = arith.addf %32, %33 : vector<8x256xf32>
    %35 = vector.extract_strided_slice %34 {offsets = [0, 0], sizes = [8, 128], strides = [1, 1]} : vector<8x256xf32> to vector<8x128xf32>
    %cst_20 = arith.constant 0.000000e+00 : f32
    %36 = vector.broadcast %cst_20 : f32 to vector<8x128xf32>
    %37 = arith.maximumf %35, %36 : vector<8x128xf32>
    %38 = vector.extract_strided_slice %34 {offsets = [0, 128], sizes = [8, 128], strides = [1, 1]} : vector<8x256xf32> to vector<8x128xf32>
    %39 = arith.negf %38 : vector<8x128xf32>
    %40 = math.exp %39 : vector<8x128xf32>
    %cst_21 = arith.constant 1.000000e+00 : f32
    %41 = vector.broadcast %cst_21 : f32 to vector<8x128xf32>
    %42 = arith.addf %41, %40 : vector<8x128xf32>
    %43 = arith.divf %41, %42 : vector<8x128xf32>
    %44 = arith.subf %37, %26 : vector<8x128xf32>
    %45 = arith.mulf %43, %44 : vector<8x128xf32>
    %46 = arith.addf %26, %45 : vector<8x128xf32>
    %c2 = arith.constant 2 : index
    %c0_22 = arith.constant 0 : index
    %c0_23 = arith.constant 0 : index
    %47 = vector.load %arg4[%c2, %c0_22, %c0_23] : memref<3x128x256xbf16, #tpu.memory_space<vmem>>, vector<1x128x256xbf16>
    %48 = vector.shape_cast %47 : vector<1x128x256xbf16> to vector<128x256xbf16>
    %c2_24 = arith.constant 2 : index
    %c0_25 = arith.constant 0 : index
    %c0_26 = arith.constant 0 : index
    %49 = vector.load %arg5[%c2_24, %c0_25, %c0_26] : memref<3x1x256xf32, #tpu.memory_space<vmem>>, vector<1x1x256xf32>
    %50 = vector.shape_cast %49 : vector<1x1x256xf32> to vector<1x256xf32>
    %51 = arith.truncf %46 : vector<8x128xf32> to vector<8x128xbf16>
    %cst_27 = arith.constant dense<0.000000e+00> : vector<8x256xf32>
    %52 = tpu.matmul %51, %48, %cst_27 {dimension_numbers = #tpu.dot_dimension_numbers<[1], [0], [0], [1], [0, 0, 1, 1], [], []>} : vector<8x128xbf16>, vector<128x256xbf16>, vector<8x256xf32> -> vector<8x256xf32>
    %53 = vector.broadcast %50 : vector<1x256xf32> to vector<8x256xf32>
    %54 = arith.addf %52, %53 : vector<8x256xf32>
    %55 = vector.extract_strided_slice %54 {offsets = [0, 0], sizes = [8, 128], strides = [1, 1]} : vector<8x256xf32> to vector<8x128xf32>
    %cst_28 = arith.constant 0.000000e+00 : f32
    %56 = vector.broadcast %cst_28 : f32 to vector<8x128xf32>
    %57 = arith.maximumf %55, %56 : vector<8x128xf32>
    %58 = vector.extract_strided_slice %54 {offsets = [0, 128], sizes = [8, 128], strides = [1, 1]} : vector<8x256xf32> to vector<8x128xf32>
    %59 = arith.negf %58 : vector<8x128xf32>
    %60 = math.exp %59 : vector<8x128xf32>
    %cst_29 = arith.constant 1.000000e+00 : f32
    %61 = vector.broadcast %cst_29 : f32 to vector<8x128xf32>
    %62 = arith.addf %61, %60 : vector<8x128xf32>
    %63 = arith.divf %61, %62 : vector<8x128xf32>
    %64 = arith.subf %57, %46 : vector<8x128xf32>
    %65 = arith.mulf %63, %64 : vector<8x128xf32>
    %66 = arith.addf %46, %65 : vector<8x128xf32>
    %67 = arith.truncf %66 : vector<8x128xf32> to vector<8x128xbf16>
    %c0_30 = arith.constant 0 : index
    %c0_31 = arith.constant 0 : index
    %68 = vector.load %arg6[%c0_30, %c0_31] : memref<128x128xbf16, #tpu.memory_space<vmem>>, vector<128x128xbf16>
    %cst_32 = arith.constant dense<0.000000e+00> : vector<8x128xf32>
    %69 = tpu.matmul %67, %68, %cst_32 {dimension_numbers = #tpu.dot_dimension_numbers<[1], [0], [0], [1], [0, 0, 1, 1], [], []>} : vector<8x128xbf16>, vector<128x128xbf16>, vector<8x128xf32> -> vector<8x128xf32>
    %c0_33 = arith.constant 0 : index
    %c0_34 = arith.constant 0 : index
    %70 = vector.load %arg7[%c0_33, %c0_34] : memref<1x128xf32, #tpu.memory_space<vmem>>, vector<1x128xf32>
    %71 = vector.broadcast %70 : vector<1x128xf32> to vector<8x128xf32>
    %72 = arith.addf %69, %71 : vector<8x128xf32>
    %c0_35 = arith.constant 0 : index
    %c0_36 = arith.constant 0 : index
    %73 = vector.load %arg8[%c0_35, %c0_36] : memref<8x128xf32, #tpu.memory_space<vmem>>, vector<8x128xf32>
    tpu.vector_store %arg8[%c0_35, %c0_36], %72 {strides = array<i32>} : memref<8x128xf32, #tpu.memory_space<vmem>>, vector<8x128xf32>,
    return
  }
  func.func @transform_0(%arg0: i32) -> (i32, i32) {
    %c0_i32 = arith.constant 0 : i32
    %c0_i32_0 = arith.constant 0 : i32
    return %arg0, %c0_i32 : i32, i32
  }
  func.func @transform_1(%arg0: i32) -> (i32, i32) {
    %c0_i32 = arith.constant 0 : i32
    %c0_i32_0 = arith.constant 0 : i32
    %c0_i32_1 = arith.constant 0 : i32
    return %c0_i32, %c0_i32_0 : i32, i32
  }
  func.func @transform_2(%arg0: i32) -> (i32, i32) {
    %c0_i32 = arith.constant 0 : i32
    %c0_i32_0 = arith.constant 0 : i32
    %c0_i32_1 = arith.constant 0 : i32
    return %c0_i32, %c0_i32_0 : i32, i32
  }
  func.func @transform_3(%arg0: i32) -> (i32, i32, i32) {
    %c0_i32 = arith.constant 0 : i32
    %c0_i32_0 = arith.constant 0 : i32
    %c0_i32_1 = arith.constant 0 : i32
    %c0_i32_2 = arith.constant 0 : i32
    return %c0_i32, %c0_i32_0, %c0_i32_1 : i32, i32, i32
  }
  func.func @transform_4(%arg0: i32) -> (i32, i32, i32) {
    %c0_i32 = arith.constant 0 : i32
    %c0_i32_0 = arith.constant 0 : i32
    %c0_i32_1 = arith.constant 0 : i32
    %c0_i32_2 = arith.constant 0 : i32
    return %c0_i32, %c0_i32_0, %c0_i32_1 : i32, i32, i32
  }
  func.func @transform_5(%arg0: i32) -> (i32, i32) {
    %c0_i32 = arith.constant 0 : i32
    %c0_i32_0 = arith.constant 0 : i32
    %c0_i32_1 = arith.constant 0 : i32
    return %c0_i32, %c0_i32_0 : i32, i32
  }
  func.func @transform_6(%arg0: i32) -> (i32, i32) {
    %c0_i32 = arith.constant 0 : i32
    %c0_i32_0 = arith.constant 0 : i32
    %c0_i32_1 = arith.constant 0 : i32
    return %c0_i32, %c0_i32_0 : i32, i32
  }
  func.func @transform_7(%arg0: i32) -> (i32, i32) {
    %c0_i32 = arith.constant 0 : i32
    %c0_i32_0 = arith.constant 0 : i32
    return %arg0, %c0_i32 : i32, i32
  }
}

</mosaic_0001>

<llo_original>
// kernel: tpu_custom_call.1
$region0: #{tpu_custom_call.1}
  #allocation0 [shape = 'u32[]', space=smem, size = 0x4, offset = 0x4, fixed_abs, tag = 'smem constant byte address 0x4 - core index']
  #allocation1 [shape = 'u32[144,128]{1,0:T(1,128)}', space=vmem, size = 0x12000, scoped, tag = 'internal scratch']
  %s0 = inlined_call_operand.hbm [shape: f32[16,128], index: 0, kind: input, shape index: {}]
  %s1 = inlined_call_operand.hbm [shape: bf16[128,128], index: 1, kind: input, shape index: {}]
  %s2 = inlined_call_operand.vmem [shape: f32[1,128], index: 2, kind: input, shape index: {}]
  %s3 = inlined_call_operand.hbm [shape: bf16[3,128,256], index: 3, kind: input, shape index: {}]
  %s4 = inlined_call_operand.vmem [shape: f32[3,1,256], index: 4, kind: input, shape index: {}]
  %s5 = inlined_call_operand.hbm [shape: bf16[128,128], index: 5, kind: input, shape index: {}]
  %s6 = inlined_call_operand.vmem [shape: f32[1,128], index: 6, kind: input, shape index: {}]
  %s7 = inlined_call_operand.hbm [shape: f32[16,128], index: 7, kind: output, shape index: {}]
  %s8 = sld [smem:[#allocation0]]
  $region77: #{tpu_custom_call.1} parent=0
    _
  %s10 = ssub.s32 1, %s8
  %s11 = scalar_select 0, %s10, %s8
  $region1: #{tpu_custom_call.1} parent=0
    #allocation2 [shape = 'u8[8192]{0}', space=vmem, size = 0x2000, scoped, tag = 'input window, operand 0']
    #allocation3 [shape = 's32[2]{0}', space=sflag, size = 0x8, scoped, tag = 'scoped memory for tpu_custom_call.1']
    #allocation4 [shape = 's32[2]{0}', space=sflag, size = 0x8, scoped, tag = 'scoped memory for tpu_custom_call.1']
    #allocation5 [shape = 'u8[32768]{0}', space=vmem, size = 0x8000, scoped, tag = 'input window, operand 1, single buffered']
    #allocation6 [shape = 's32[1]{0}', space=sflag, size = 0x4, scoped, tag = 'scoped memory for tpu_custom_call.1']
    #allocation7 [shape = 'u8[196608]{0}', space=vmem, size = 0x30000, scoped, tag = 'input window, operand 3, single buffered']
    #allocation8 [shape = 'u8[32768]{0}', space=vmem, size = 0x8000, scoped, tag = 'input window, operand 5, single buffered']
    #allocation9 [shape = 's32[1]{0}', space=sflag, size = 0x4, scoped, tag = 'scoped memory for tpu_custom_call.1']
    #allocation10 [shape = 'u8[8192]{0}', space=vmem, size = 0x2000, scoped, tag = 'output window, operand 0']
    %12 = vsyncpa [#allocation3], 0
    %s13 = scalar_lea.sflag [#allocation3], 1
    %14 = vsyncpa %s13, 0
    %15 = vsyncpa [#allocation6], 0
    %16 = vsyncpa [#allocation9], 0
    %17 = vsyncpa [#allocation4], 0
    %s18 = scalar_lea.sflag [#allocation4], 1
    %19 = vsyncpa %s18, 0
    loop: start=0, step=1, limit=4
    $region2: #{tpu_custom_call.1} parent=1 // loop_pre_header
      _
    $region3: #{tpu_custom_call.1} parent=1 // loop_header
      %s21 = sphi 0, %s25
      %p22 = scmp.ge.s32.totalorder %s21, 4
      %s31 = sphi 0, %s33
      %s34 = sphi 0, %s31
      %s35 = sphi 0, %s34
      %s51 = sphi 0, %s35
      %s55 = sphi 0, %s55
      %s57 = sphi 0, %s55
      %s58 = sphi 0, %s57
      %s72 = sphi 0, %s58
      %s76 = sphi 0, %s76
      %s78 = sphi 0, %s76
      %s79 = sphi 0, %s78
      %s93 = sphi 0, %s79
      %s97 = sphi 0, %s97
      %s99 = sphi 0, %s97
      %s100 = sphi 0, %s99
      %s114 = sphi 0, %s100
      %s118 = sphi 0, %s118
      %s120 = sphi 0, %s118
      %s121 = sphi 0, %s120
      %s135 = sphi 0, %s121
      %s139 = sphi 0, %s139
      %s141 = sphi 0, %s139
      %s142 = sphi 0, %s141
      %s156 = sphi 0, %s142
      %s160 = sphi 0, %s160
      %s162 = sphi 0, %s160
      %s163 = sphi 0, %s162
      %s177 = sphi 0, %s163
      %s183 = sphi 0, %s185
      %s186 = sphi 0, %s183
      %s187 = sphi 0, %s186
      %s203 = sphi 0, %s187
    $region4: #{tpu_custom_call.1} parent=1 // loop_header_branch
      %24 = sbr.rel (%p22) target = $region8
    $region5: #{tpu_custom_call.1} parent=1 // loop_body
      %s26 = ssub.s32 %s21, 1
      %s27 = ssub.s32 %s21, 2
      %s28 = sadd.s32 %s21, 1
      %s29 = ssub.s32 %s21, %s28
      %p30 = scmp.eq.s32.totalorder %s29, 0
      %s32 = sadd.s32 %s31, 1
      %s33 = scalar_select %p30, %s31, %s32
      %p36 = pneg %p30
      %p37 = scmp.eq.s32.totalorder %s21, 1
      %p38 = por %p36, %p37
      %p39 = scmp.ne.s32.totalorder %s31, %s34
      %p40 = scmp.eq.s32.totalorder %s21, 0
      %p41 = por %p39, %p40
      %p42 = scmp.ne.s32.totalorder %s31, %s34
      %p43 = scmp.eq.s32.totalorder %s26, 1
      %p44 = por %p42, %p43
      %p45 = scmp.ne.s32.totalorder %s34, %s35
      %p46 = scmp.eq.s32.totalorder %s26, 0
      %p47 = por %p45, %p46
      %p48 = scmp.ne.s32.totalorder %s34, %s35
      %p49 = scmp.eq.s32.totalorder %s27, 1
      %p50 = por %p48, %p49
      %p52 = scmp.ne.s32.totalorder %s35, %s51
      %p53 = scmp.eq.s32.totalorder %s27, 0
      %p54 = por %p52, %p53
      %s56 = sadd.s32 %s55, 1
      %p59 = scmp.eq.s32.totalorder %s21, 1
      %p60 = scmp.ne.s32.totalorder %s55, %s57
      %p61 = scmp.eq.s32.totalorder %s21, 0
      %p62 = por %p60, %p61
      %p63 = scmp.ne.s32.totalorder %s55, %s57
      %p64 = scmp.eq.s32.totalorder %s26, 1
      %p65 = por %p63, %p64
      %p66 = scmp.ne.s32.totalorder %s57, %s58
      %p67 = scmp.eq.s32.totalorder %s26, 0
      %p68 = por %p66, %p67
      %p69 = scmp.ne.s32.totalorder %s57, %s58
      %p70 = scmp.eq.s32.totalorder %s27, 1
      %p71 = por %p69, %p70
      %p73 = scmp.ne.s32.totalorder %s58, %s72
      %p74 = scmp.eq.s32.totalorder %s27, 0
      %p75 = por %p73, %p74
      %s77 = sadd.s32 %s76, 1
      %p80 = scmp.eq.s32.totalorder %s21, 1
      %p81 = scmp.ne.s32.totalorder %s76, %s78
      %p82 = scmp.eq.s32.totalorder %s21, 0
      %p83 = por %p81, %p82
      %p84 = scmp.ne.s32.totalorder %s76, %s78
      %p85 = scmp.eq.s32.totalorder %s26, 1
      %p86 = por %p84, %p85
      %p87 = scmp.ne.s32.totalorder %s78, %s79
      %p88 = scmp.eq.s32.totalorder %s26, 0
      %p89 = por %p87, %p88
      %p90 = scmp.ne.s32.totalorder %s78, %s79
      %p91 = scmp.eq.s32.totalorder %s27, 1
      %p92 = por %p90, %p91
      %p94 = scmp.ne.s32.totalorder %s79, %s93
      %p95 = scmp.eq.s32.totalorder %s27, 0
      %p96 = por %p94, %p95
      %s98 = sadd.s32 %s97, 1
      %p101 = scmp.eq.s32.totalorder %s21, 1
      %p102 = scmp.ne.s32.totalorder %s97, %s99
      %p103 = scmp.eq.s32.totalorder %s21, 0
      %p104 = por %p102, %p103
      %p105 = scmp.ne.s32.totalorder %s97, %s99
      %p106 = scmp.eq.s32.totalorder %s26, 1
      %p107 = por %p105, %p106
      %p108 = scmp.ne.s32.totalorder %s99, %s100
      %p109 = scmp.eq.s32.totalorder %s26, 0
      %p110 = por %p108, %p109
      %p111 = scmp.ne.s32.totalorder %s99, %s100
      %p112 = scmp.eq.s32.totalorder %s27, 1
      %p113 = por %p111, %p112
      %p115 = scmp.ne.s32.totalorder %s100, %s114
      %p116 = scmp.eq.s32.totalorder %s27, 0
      %p117 = por %p115, %p116
      %s119 = sadd.s32 %s118, 1
      %p122 = scmp.eq.s32.totalorder %s21, 1
      %p123 = scmp.ne.s32.totalorder %s118, %s120
      %p124 = scmp.eq.s32.totalorder %s21, 0
      %p125 = por %p123, %p124
      %p126 = scmp.ne.s32.totalorder %s118, %s120
      %p127 = scmp.eq.s32.totalorder %s26, 1
      %p128 = por %p126, %p127
      %p129 = scmp.ne.s32.totalorder %s120, %s121
      %p130 = scmp.eq.s32.totalorder %s26, 0
      %p131 = por %p129, %p130
      %p132 = scmp.ne.s32.totalorder %s120, %s121
      %p133 = scmp.eq.s32.totalorder %s27, 1
      %p134 = por %p132, %p133
      %p136 = scmp.ne.s32.totalorder %s121, %s135
      %p137 = scmp.eq.s32.totalorder %s27, 0
      %p138 = por %p136, %p137
      %s140 = sadd.s32 %s139, 1
      %p143 = scmp.eq.s32.totalorder %s21, 1
      %p144 = scmp.ne.s32.totalorder %s139, %s141
      %p145 = scmp.eq.s32.totalorder %s21, 0
      %p146 = por %p144, %p145
      %p147 = scmp.ne.s32.totalorder %s139, %s141
      %p148 = scmp.eq.s32.totalorder %s26, 1
      %p149 = por %p147, %p148
      %p150 = scmp.ne.s32.totalorder %s141, %s142
      %p151 = scmp.eq.s32.totalorder %s26, 0
      %p152 = por %p150, %p151
      %p153 = scmp.ne.s32.totalorder %s141, %s142
      %p154 = scmp.eq.s32.totalorder %s27, 1
      %p155 = por %p153, %p154
      %p157 = scmp.ne.s32.totalorder %s142, %s156
      %p158 = scmp.eq.s32.totalorder %s27, 0
      %p159 = por %p157, %p158
      %s161 = sadd.s32 %s160, 1
      %p164 = scmp.eq.s32.totalorder %s21, 1
      %p165 = scmp.ne.s32.totalorder %s160, %s162
      %p166 = scmp.eq.s32.totalorder %s21, 0
      %p167 = por %p165, %p166
      %p168 = scmp.ne.s32.totalorder %s160, %s162
      %p169 = scmp.eq.s32.totalorder %s26, 1
      %p170 = por %p168, %p169
      %p171 = scmp.ne.s32.totalorder %s162, %s163
      %p172 = scmp.eq.s32.totalorder %s26, 0
      %p173 = por %p171, %p172
      %p174 = scmp.ne.s32.totalorder %s162, %s163
      %p175 = scmp.eq.s32.totalorder %s27, 1
      %p176 = por %p174, %p175
      %p178 = scmp.ne.s32.totalorder %s163, %s177
      %p179 = scmp.eq.s32.totalorder %s27, 0
      %p180 = por %p178, %p179
      %s181 = ssub.s32 %s21, %s28
      %p182 = scmp.eq.s32.totalorder %s181, 0
      %s184 = sadd.s32 %s183, 1
      %s185 = scalar_select %p182, %s183, %s184
      %p188 = pneg %p182
      %p189 = scmp.eq.s32.totalorder %s21, 1
      %p190 = por %p188, %p189
      %p191 = scmp.ne.s32.totalorder %s183, %s186
      %p192 = scmp.eq.s32.totalorder %s21, 0
      %p193 = por %p191, %p192
      %p194 = scmp.ne.s32.totalorder %s183, %s186
      %p195 = scmp.eq.s32.totalorder %s26, 1
      %p196 = por %p194, %p195
      %p197 = scmp.ne.s32.totalorder %s186, %s187
      %p198 = scmp.eq.s32.totalorder %s26, 0
      %p199 = por %p197, %p198
      %p200 = scmp.ne.s32.totalorder %s186, %s187
      %p201 = scmp.eq.s32.totalorder %s27, 1
      %p202 = por %p200, %p201
      %p204 = scmp.ne.s32.totalorder %s187, %s203
      %p205 = scmp.eq.s32.totalorder %s27, 0
      %p206 = por %p204, %p205
      %p207 = scmp.le.s32.totalorder 1, %s21
      %p208 = scmp.lt.s32.totalorder %s21, 3
      %p209 = pnand %p207, %p208
      %p210 = pneg %p209
      // Predicated region
      $region9: #{tpu_custom_call.1} parent=5 // pred_check
        _
      $region10: #{tpu_custom_call.1} parent=5 // pred_check_branch
        %212 = sbr.rel (%p209) target = $region12
      $region11: #{tpu_custom_call.1} parent=5 // pred_region
        %s213 = ssub.s32 %s21, 1
        // Predicated region
        $region13: #{tpu_custom_call.1} parent=11 // pred_check
          %p214 = pneg %p68
        $region14: #{tpu_custom_call.1} parent=11 // pred_check_branch
          %216 = sbr.rel (%p214) target = $region16
        $region15: #{tpu_custom_call.1} parent=11 // pred_region
          %s218 = ssub.s32 1024, 1024
          %219 = vsyncadd [#allocation6], %s218
          %s220 = sshll.u32 [#allocation5], 4
          %s221 = int_to_ptr.vmem [resolvable:$true] %s220
          %226 = dma.hbm_to_vmem [thread:$0]  %s1, 1024, %s221, [#allocation6], 64, 64, 4
        $region16: #{tpu_custom_call.1} parent=11 // pred_fallthru
          _
        // Predicated region
        $region17: #{tpu_custom_call.1} parent=11 // pred_check
          %p227 = pneg %p89
        $region18: #{tpu_custom_call.1} parent=11 // pred_check_branch
          %229 = sbr.rel (%p227) target = $region20
        $region19: #{tpu_custom_call.1} parent=11 // pred_region
          _
        $region20: #{tpu_custom_call.1} parent=11 // pred_fallthru
          _
        // Predicated region
        $region21: #{tpu_custom_call.1} parent=11 // pred_check
          %p230 = pneg %p110
        $region22: #{tpu_custom_call.1} parent=11 // pred_check_branch
          %232 = sbr.rel (%p230) target = $region24
        $region23: #{tpu_custom_call.1} parent=11 // pred_region
          %s234 = ssub.s32 6144, 6144
          %235 = vsyncadd [#allocation6], %s234
          %s236 = sshll.u32 [#allocation7], 4
          %s237 = int_to_ptr.vmem [resolvable:$true] %s236
          %242 = dma.hbm_to_vmem [thread:$0]  %s3, 6144, %s237, [#allocation6], 128, 128, 8
        $region24: #{tpu_custom_call.1} parent=11 // pred_fallthru
          _
        // Predicated region
        $region25: #{tpu_custom_call.1} parent=11 // pred_check
          %p243 = pneg %p131
        $region26: #{tpu_custom_call.1} parent=11 // pred_check_branch
          %245 = sbr.rel (%p243) target = $region28
        $region27: #{tpu_custom_call.1} parent=11 // pred_region
          _
        $region28: #{tpu_custom_call.1} parent=11 // pred_fallthru
          _
        // Predicated region
        $region29: #{tpu_custom_call.1} parent=11 // pred_check
          %p246 = pneg %p152
        $region30: #{tpu_custom_call.1} parent=11 // pred_check_branch
          %248 = sbr.rel (%p246) target = $region32
        $region31: #{tpu_custom_call.1} parent=11 // pred_region
          %s250 = ssub.s32 1024, 1024
          %251 = vsyncadd [#allocation9], %s250
          %s252 = sshll.u32 [#allocation8], 4
          %s253 = int_to_ptr.vmem [resolvable:$true] %s252
          %258 = dma.hbm_to_vmem [thread:$0]  %s5, 1024, %s253, [#allocation9], 64, 64, 4
        $region32: #{tpu_custom_call.1} parent=11 // pred_fallthru
          _
        // Predicated region
        $region33: #{tpu_custom_call.1} parent=11 // pred_check
          %p259 = pneg %p173
        $region34: #{tpu_custom_call.1} parent=11 // pred_check_branch
          %261 = sbr.rel (%p259) target = $region36
        $region35: #{tpu_custom_call.1} parent=11 // pred_region
          _
        $region36: #{tpu_custom_call.1} parent=11 // pred_fallthru
          _
      $region12: #{tpu_custom_call.1} parent=5 // pred_fallthru
        _
      %p262 = scmp.lt.s32.totalorder %s21, 2
      // Predicated region
      $region37: #{tpu_custom_call.1} parent=5 // pred_check
        %p263 = pneg %p262
      $region38: #{tpu_custom_call.1} parent=5 // pred_check_branch
        %265 = sbr.rel (%p263) target = $region40
      $region39: #{tpu_custom_call.1} parent=5 // pred_region
        // Predicated region
        $region41: #{tpu_custom_call.1} parent=39 // pred_check
          %p266 = pneg %p41
        $region42: #{tpu_custom_call.1} parent=39 // pred_check_branch
          %268 = sbr.rel (%p266) target = $region44
        $region43: #{tpu_custom_call.1} parent=39 // pred_region
          %s269 = sand.u32 %s31, 1
          %s270 = scalar_lea.sflag [#allocation3], %s269
          %s271 = sand.u32 %s31, 1
          %s272 = smul.addr %s271, 8
          %s273 = scalar_lea.vmem [#allocation2], %s272
          %s275 = ssub.s32 128, 128
          %276 = vsyncadd %s270, %s275
          %s277 = smul.addr %s21, 128
          %s278 = scalar_lea.hbm %s0, %s277
          %s280 = sshll.u32 %s273, 4
          %s281 = int_to_ptr.vmem [resolvable:$true] %s280
          %283 = dma.hbm_to_vmem [thread:$0]  %s278, 128, %s281, %s270
        $region44: #{tpu_custom_call.1} parent=39 // pred_fallthru
          _
      $region40: #{tpu_custom_call.1} parent=5 // pred_fallthru
        _
      %p284 = scmp.le.s32.totalorder 1, %s21
      %p285 = scmp.lt.s32.totalorder %s21, 3
      %p286 = pnand %p284, %p285
      %p287 = pneg %p286
      // Predicated region
      $region45: #{tpu_custom_call.1} parent=5 // pred_check
        _
      $region46: #{tpu_custom_call.1} parent=5 // pred_check_branch
        %289 = sbr.rel (%p286) target = $region48
      $region47: #{tpu_custom_call.1} parent=5 // pred_region
        %s290 = ssub.s32 %s21, 1
        %s291 = sand.u32 %s34, 1
        %s292 = scalar_lea.sflag [#allocation3], %s291
        %s293 = sand.u32 %s34, 1
        %s294 = smul.addr %s293, 8
        %s295 = scalar_lea.vmem [#allocation2], %s294
        // Predicated region
        $region49: #{tpu_custom_call.1} parent=47 // pred_check
          %p296 = pneg %p47
        $region50: #{tpu_custom_call.1} parent=47 // pred_check_branch
          %298 = sbr.rel (%p296) target = $region52
        $region51: #{tpu_custom_call.1} parent=47 // pred_region
          %299 = dma.done %s292, 128
        $region52: #{tpu_custom_call.1} parent=47 // pred_fallthru
          _
        // Predicated region
        $region53: #{tpu_custom_call.1} parent=47 // pred_check
          %p300 = pneg %p68
        $region54: #{tpu_custom_call.1} parent=47 // pred_check_branch
          %302 = sbr.rel (%p300) target = $region56
        $region55: #{tpu_custom_call.1} parent=47 // pred_region
          %303 = dma.done [#allocation6], 1024
        $region56: #{tpu_custom_call.1} parent=47 // pred_fallthru
          _
        // Predicated region
        $region57: #{tpu_custom_call.1} parent=47 // pred_check
          %p304 = pneg %p110
        $region58: #{tpu_custom_call.1} parent=47 // pred_check_branch
          %306 = sbr.rel (%p304) target = $region60
        $region59: #{tpu_custom_call.1} parent=47 // pred_region
          %307 = dma.done [#allocation6], 6144
        $region60: #{tpu_custom_call.1} parent=47 // pred_fallthru
          _
        // Predicated region
        $region61: #{tpu_custom_call.1} parent=47 // pred_check
          %p308 = pneg %p152
        $region62: #{tpu_custom_call.1} parent=47 // pred_check_branch
          %310 = sbr.rel (%p308) target = $region64
        $region63: #{tpu_custom_call.1} parent=47 // pred_region
          %311 = dma.done [#allocation9], 1024
        $region64: #{tpu_custom_call.1} parent=47 // pred_fallthru
          _
        %s312 = sand.u32 %s34, 1
        %s313 = scalar_lea.sflag [#allocation3], %s312
        %s314 = sand.u32 %s34, 1
        %s315 = smul.addr %s314, 8
        %s316 = scalar_lea.vmem [#allocation2], %s315
        %p317 = pneg %p47
        %p318 = pneg %p44
        %p319 = pneg %p68
        %p320 = pneg %p65
        %p321 = pneg %p89
        %p322 = pneg %p86
        %p323 = pneg %p110
        %p324 = pneg %p107
        %p325 = pneg %p131
        %p326 = pneg %p128
        %p327 = pneg %p152
        %p328 = pneg %p149
        %p329 = pneg %p173
        %p330 = pneg %p170
        %p331 = pneg %p199
        %p332 = pneg %p196
        %s333 = sand.u32 %s186, 1
        %s334 = scalar_lea.sflag [#allocation4], %s333
        %s335 = sand.u32 %s186, 1
        %s336 = smul.addr %s335, 8
        %s337 = scalar_lea.vmem [#allocation10], %s336
        %v339 = vld [vmem:[%s295] sm:$0xff]
        %v340 = vpack.c.bf16 %v339, %v339
        %v341 = vld [vmem:[#allocation5] sm:$0xf]
        %v342 = vld [vmem:[#allocation5 + $0x4] sm:$0xf]
        %v343 = vld [vmem:[#allocation5 + $0x8] sm:$0xf]
        %v344 = vld [vmem:[#allocation5 + $0xc] sm:$0xf]
        %v345 = vld [vmem:[#allocation5 + $0x10] sm:$0xf]
        %v346 = vld [vmem:[#allocation5 + $0x14] sm:$0xf]
        %v347 = vld [vmem:[#allocation5 + $0x18] sm:$0xf]
        %v348 = vld [vmem:[#allocation5 + $0x1c] sm:$0xf]
        %v349 = vld [vmem:[#allocation5 + $0x20] sm:$0xf]
        %v350 = vld [vmem:[#allocation5 + $0x24] sm:$0xf]
        %v351 = vld [vmem:[#allocation5 + $0x28] sm:$0xf]
        %v352 = vld [vmem:[#allocation5 + $0x2c] sm:$0xf]
        %v353 = vld [vmem:[#allocation5 + $0x30] sm:$0xf]
        %v354 = vld [vmem:[#allocation5 + $0x34] sm:$0xf]
        %v355 = vld [vmem:[#allocation5 + $0x38] sm:$0xf]
        %v356 = vld [vmem:[#allocation5 + $0x3c] sm:$0xf]
        %v357 = vld [vmem:[%s2] sm:$0x1]
        %v359 = vlaneseq
        %v360 = vshrl.u32 %v359, 7
        %v361 = vsub.s32 0, %v360
        %v362 = vrot.slane %v357, %v361
        %v380 = vunpack.c.l.b16 %v341
        %v381 = vunpack.c.l.b16 %v342
        %v382 = vunpack.c.l.b16 %v343
        %v383 = vunpack.c.l.b16 %v344
        %v384 = vunpack.c.l.b16 %v345
        %v385 = vunpack.c.l.b16 %v346
        %v386 = vunpack.c.l.b16 %v347
        %v387 = vunpack.c.l.b16 %v348
        %v388 = vunpack.c.l.b16 %v349
        %v389 = vunpack.c.l.b16 %v350
        %v390 = vunpack.c.l.b16 %v351
        %v391 = vunpack.c.l.b16 %v352
        %v392 = vunpack.c.l.b16 %v353
        %v393 = vunpack.c.l.b16 %v354
        %v394 = vunpack.c.l.b16 %v355
        %v395 = vunpack.c.l.b16 %v356
        %v396 = vpack.c.b16 %v381, %v380
        %v397 = vpack.c.b16 %v383, %v382
        %v398 = vpack.c.b16 %v385, %v384
        %v399 = vpack.c.b16 %v387, %v386
        %v400 = vpack.c.b16 %v389, %v388
        %v401 = vpack.c.b16 %v391, %v390
        %v402 = vpack.c.b16 %v393, %v392
        %v403 = vpack.c.b16 %v395, %v394
        %412 = vmatprep.subr.bf16.mxu0 0
        %413 = vmatpush1.bf16.msra.mxu0 %v403
        %414 = vmatprep.subr.bf16.mxu0 0
        %415 = vmatpush1.bf16.msra.mxu0 %v402
        %416 = vmatprep.subr.bf16.mxu0 0
        %417 = vmatpush1.bf16.msra.mxu0 %v401
        %418 = vmatprep.subr.bf16.mxu0 0
        %419 = vmatpush1.bf16.msra.mxu0 %v400
        %420 = vmatprep.subr.bf16.mxu0 0
        %421 = vmatpush1.bf16.msra.mxu0 %v399
        %422 = vmatprep.subr.bf16.mxu0 0
        %423 = vmatpush1.bf16.msra.mxu0 %v398
        %424 = vmatprep.subr.bf16.mxu0 0
        %425 = vmatpush1.bf16.msra.mxu0 %v397
        %426 = vmatprep.subr.bf16.mxu0 0
        %427 = vmatpush1.bf16.msra.mxu0 %v396
        %428 = vmatprep.subr.bf16.mxu0 0
        %429 = vmatpush2.bf16.msra.mxu0 0
        %430 = vmatprep.subr.bf16.mxu0 0
        %431 = vmatpush2.bf16.msra.mxu0 0
        %432 = vmatprep.subr.bf16.mxu0 0
        %433 = vmatpush2.bf16.msra.mxu0 0
        %434 = vmatprep.subr.bf16.mxu0 0
        %435 = vmatpush2.bf16.msra.mxu0 0
        %436 = vmatprep.subr.bf16.mxu0 0
        %437 = vmatpush2.bf16.msra.mxu0 0
        %438 = vmatprep.subr.bf16.mxu0 0
        %439 = vmatpush2.bf16.msra.mxu0 0
        %440 = vmatprep.subr.bf16.mxu0 0
        %441 = vmatpush2.bf16.msra.mxu0 0
        %442 = vmatprep.subr.bf16.mxu0 0
        %443 = vmatpush2.bf16.msra.mxu0 0
        %444 = vmatprep.mubr.bf16.mxu0 0
        %445 = vmatmul.mubr.bf16.gmra.mxu0 %v340
        %v446 = vpop.f32.mrf.mxu0
        %v447 = vadd.f32 %v362, %v446
        %v448 = vpop.f32.mrf.mxu0
        %v449 = vpop.f32.mrf.mxu0
        %v450 = vpop.f32.mrf.mxu0
        %451 = vdwg.mxu0
        %v452 = vld [vmem:[#allocation7] sm:$0xff]
        %v453 = vld [vmem:[#allocation7 + $0x8] sm:$0xff]
        %v454 = vld [vmem:[#allocation7 + $0x10] sm:$0xff]
        %v455 = vld [vmem:[#allocation7 + $0x18] sm:$0xff]
        %v456 = vld [vmem:[#allocation7 + $0x20] sm:$0xff]
        %v457 = vld [vmem:[#allocation7 + $0x28] sm:$0xff]
        %v458 = vld [vmem:[#allocation7 + $0x30] sm:$0xff]
        %v459 = vld [vmem:[#allocation7 + $0x38] sm:$0xff]
        %v460 = vld [vmem:[#allocation7 + $0x40] sm:$0xff]
        %v461 = vld [vmem:[#allocation7 + $0x48] sm:$0xff]
        %v462 = vld [vmem:[#allocation7 + $0x50] sm:$0xff]
        %v463 = vld [vmem:[#allocation7 + $0x58] sm:$0xff]
        %v464 = vld [vmem:[#allocation7 + $0x60] sm:$0xff]
        %v465 = vld [vmem:[#allocation7 + $0x68] sm:$0xff]
        %v466 = vld [vmem:[#allocation7 + $0x70] sm:$0xff]
        %v467 = vld [vmem:[#allocation7 + $0x78] sm:$0xff]
        %v468 = vld [vmem:[%s4] sm:$0x3]
        %v469 = vpack.c.bf16 %v447, %v447
        %v471 = vlaneseq
        %v472 = vshrl.u32 %v471, 7
        %v473 = vsub.s32 0, %v472
        %v474 = vrot.slane %v468, %v473
        %v475 = vlaneseq
        %v476 = vshrl.u32 %v475, 7
        %v477 = vsub.s32 1, %v476
        %v478 = vrot.slane %v468, %v477
        %v497 = vunpack.c.l.b16 %v452
        %v498 = vunpack.c.h.b16 %v452
        %v499 = vunpack.c.l.b16 %v453
        %v500 = vunpack.c.h.b16 %v453
        %v501 = vunpack.c.l.b16 %v454
        %v502 = vunpack.c.h.b16 %v454
        %v503 = vunpack.c.l.b16 %v455
        %v504 = vunpack.c.h.b16 %v455
        %v505 = vunpack.c.l.b16 %v456
        %v506 = vunpack.c.h.b16 %v456
        %v507 = vunpack.c.l.b16 %v457
        %v508 = vunpack.c.h.b16 %v457
        %v509 = vunpack.c.l.b16 %v458
        %v510 = vunpack.c.h.b16 %v458
        %v511 = vunpack.c.l.b16 %v459
        %v512 = vunpack.c.h.b16 %v459
        %v513 = vunpack.c.l.b16 %v460
        %v514 = vunpack.c.h.b16 %v460
        %v515 = vunpack.c.l.b16 %v461
        %v516 = vunpack.c.h.b16 %v461
        %v517 = vunpack.c.l.b16 %v462
        %v518 = vunpack.c.h.b16 %v462
        %v519 = vunpack.c.l.b16 %v463
        %v520 = vunpack.c.h.b16 %v463
        %v521 = vunpack.c.l.b16 %v464
        %v522 = vunpack.c.h.b16 %v464
        %v523 = vunpack.c.l.b16 %v465
        %v524 = vunpack.c.h.b16 %v465
        %v525 = vunpack.c.l.b16 %v466
        %v526 = vunpack.c.h.b16 %v466
        %v527 = vunpack.c.l.b16 %v467
        %v528 = vunpack.c.h.b16 %v467
        %v529 = vpack.c.b16 %v499, %v497
        %v530 = vpack.c.b16 %v500, %v498
        %v531 = vpack.c.b16 %v503, %v501
        %v532 = vpack.c.b16 %v504, %v502
        %v533 = vpack.c.b16 %v507, %v505
        %v534 = vpack.c.b16 %v508, %v506
        %v535 = vpack.c.b16 %v511, %v509
        %v536 = vpack.c.b16 %v512, %v510
        %v537 = vpack.c.b16 %v515, %v513
        %v538 = vpack.c.b16 %v516, %v514
        %v539 = vpack.c.b16 %v519, %v517
        %v540 = vpack.c.b16 %v520, %v518
        %v541 = vpack.c.b16 %v523, %v521
        %v542 = vpack.c.b16 %v524, %v522
        %v543 = vpack.c.b16 %v527, %v525
        %v544 = vpack.c.b16 %v528, %v526
        %561 = vmatprep.subr.bf16.mxu0 %v544
        %562 = vmatpush1.bf16.msra.mxu0 %v543
        %563 = vmatprep.subr.bf16.mxu0 %v542
        %564 = vmatpush1.bf16.msra.mxu0 %v541
        %565 = vmatprep.subr.bf16.mxu0 %v540
        %566 = vmatpush1.bf16.msra.mxu0 %v539
        %567 = vmatprep.subr.bf16.mxu0 %v538
        %568 = vmatpush1.bf16.msra.mxu0 %v537
        %569 = vmatprep.subr.bf16.mxu0 %v536
        %570 = vmatpush1.bf16.msra.mxu0 %v535
        %571 = vmatprep.subr.bf16.mxu0 %v534
        %572 = vmatpush1.bf16.msra.mxu0 %v533
        %573 = vmatprep.subr.bf16.mxu0 %v532
        %574 = vmatpush1.bf16.msra.mxu0 %v531
        %575 = vmatprep.subr.bf16.mxu0 %v530
        %576 = vmatpush1.bf16.msra.mxu0 %v529
        %577 = vmatprep.subr.bf16.mxu0 0
        %578 = vmatpush2.bf16.msra.mxu0 0
        %579 = vmatprep.subr.bf16.mxu0 0
        %580 = vmatpush2.bf16.msra.mxu0 0
        %581 = vmatprep.subr.bf16.mxu0 0
        %582 = vmatpush2.bf16.msra.mxu0 0
        %583 = vmatprep.subr.bf16.mxu0 0
        %584 = vmatpush2.bf16.msra.mxu0 0
        %585 = vmatprep.subr.bf16.mxu0 0
        %586 = vmatpush2.bf16.msra.mxu0 0
        %587 = vmatprep.subr.bf16.mxu0 0
        %588 = vmatpush2.bf16.msra.mxu0 0
        %589 = vmatprep.subr.bf16.mxu0 0
        %590 = vmatpush2.bf16.msra.mxu0 0
        %591 = vmatprep.subr.bf16.mxu0 0
        %592 = vmatpush2.bf16.msra.mxu0 0
        %593 = vmatprep.mubr.bf16.mxu0 0
        %594 = vmatmul.mubr.bf16.gmra.mxu0 %v469
        %v595 = vpop.f32.mrf.mxu0
        %v596 = vadd.f32 %v474, %v595
        %v597 = vpop.f32.mrf.mxu0
        %v598 = vadd.f32 %v478, %v597
        %v599 = vpop.f32.mrf.mxu0
        %v600 = vpop.f32.mrf.mxu0
        %601 = vdwg.mxu0
        %v602 = vmax.f32 %v596, 0.0
        %v603 = vxor.u32 %v598, 2147483648
        %v604 = vmul.f32 %v603, 1.442695
        %v605 = vpow.pop %v604
        %v606 = vadd.f32 %v605, 1.0
        %v607 = vrcp.pop %v606
        %v608 = vmul.f32 1.0, %v607
        %v609 = vsub.f32 %v602, %v447
        %v610 = vmul.f32 %v608, %v609
        %v611 = vadd.f32 %v447, %v610
        %s612 = scalar_lea.vmem [#allocation7], 128
        %v613 = vld [vmem:[%s612] sm:$0xff]
        %v614 = vld [vmem:[%s612 + $0x8] sm:$0xff]
        %v615 = vld [vmem:[%s612 + $0x10] sm:$0xff]
        %v616 = vld [vmem:[%s612 + $0x18] sm:$0xff]
        %v617 = vld [vmem:[%s612 + $0x20] sm:$0xff]
        %v618 = vld [vmem:[%s612 + $0x28] sm:$0xff]
        %v619 = vld [vmem:[%s612 + $0x30] sm:$0xff]
        %v620 = vld [vmem:[%s612 + $0x38] sm:$0xff]
        %v621 = vld [vmem:[%s612 + $0x40] sm:$0xff]
        %v622 = vld [vmem:[%s612 + $0x48] sm:$0xff]
        %v623 = vld [vmem:[%s612 + $0x50] sm:$0xff]
        %v624 = vld [vmem:[%s612 + $0x58] sm:$0xff]
        %v625 = vld [vmem:[%s612 + $0x60] sm:$0xff]
        %v626 = vld [vmem:[%s612 + $0x68] sm:$0xff]
        %v627 = vld [vmem:[%s612 + $0x70] sm:$0xff]
        %v628 = vld [vmem:[%s612 + $0x78] sm:$0xff]
        %s629 = scalar_lea.vmem %s4, 2
        %v630 = vld [vmem:[%s629] sm:$0x3]
        %v631 = vpack.c.bf16 %v611, %v611
        %v633 = vlaneseq
        %v634 = vshrl.u32 %v633, 7
        %v635 = vsub.s32 0, %v634
        %v636 = vrot.slane %v630, %v635
        %v637 = vlaneseq
        %v638 = vshrl.u32 %v637, 7
        %v639 = vsub.s32 1, %v638
        %v640 = vrot.slane %v630, %v639
        %v659 = vunpack.c.l.b16 %v613
        %v660 = vunpack.c.h.b16 %v613
        %v661 = vunpack.c.l.b16 %v614
        %v662 = vunpack.c.h.b16 %v614
        %v663 = vunpack.c.l.b16 %v615
        %v664 = vunpack.c.h.b16 %v615
        %v665 = vunpack.c.l.b16 %v616
        %v666 = vunpack.c.h.b16 %v616
        %v667 = vunpack.c.l.b16 %v617
        %v668 = vunpack.c.h.b16 %v617
        %v669 = vunpack.c.l.b16 %v618
        %v670 = vunpack.c.h.b16 %v618
        %v671 = vunpack.c.l.b16 %v619
        %v672 = vunpack.c.h.b16 %v619
        %v673 = vunpack.c.l.b16 %v620
        %v674 = vunpack.c.h.b16 %v620
        %v675 = vunpack.c.l.b16 %v621
        %v676 = vunpack.c.h.b16 %v621
        %v677 = vunpack.c.l.b16 %v622
        %v678 = vunpack.c.h.b16 %v622
        %v679 = vunpack.c.l.b16 %v623
        %v680 = vunpack.c.h.b16 %v623
        %v681 = vunpack.c.l.b16 %v624
        %v682 = vunpack.c.h.b16 %v624
        %v683 = vunpack.c.l.b16 %v625
        %v684 = vunpack.c.h.b16 %v625
        %v685 = vunpack.c.l.b16 %v626
        %v686 = vunpack.c.h.b16 %v626
        %v687 = vunpack.c.l.b16 %v627
        %v688 = vunpack.c.h.b16 %v627
        %v689 = vunpack.c.l.b16 %v628
        %v690 = vunpack.c.h.b16 %v628
        %v691 = vpack.c.b16 %v661, %v659
        %v692 = vpack.c.b16 %v662, %v660
        %v693 = vpack.c.b16 %v665, %v663
        %v694 = vpack.c.b16 %v666, %v664
        %v695 = vpack.c.b16 %v669, %v667
        %v696 = vpack.c.b16 %v670, %v668
        %v697 = vpack.c.b16 %v673, %v671
        %v698 = vpack.c.b16 %v674, %v672
        %v699 = vpack.c.b16 %v677, %v675
        %v700 = vpack.c.b16 %v678, %v676
        %v701 = vpack.c.b16 %v681, %v679
        %v702 = vpack.c.b16 %v682, %v680
        %v703 = vpack.c.b16 %v685, %v683
        %v704 = vpack.c.b16 %v686, %v684
        %v705 = vpack.c.b16 %v689, %v687
        %v706 = vpack.c.b16 %v690, %v688
        %723 = vmatprep.subr.bf16.mxu0 %v706
        %724 = vmatpush1.bf16.msra.mxu0 %v705
        %725 = vmatprep.subr.bf16.mxu0 %v704
        %726 = vmatpush1.bf16.msra.mxu0 %v703
        %727 = vmatprep.subr.bf16.mxu0 %v702
        %728 = vmatpush1.bf16.msra.mxu0 %v701
        %729 = vmatprep.subr.bf16.mxu0 %v700
        %730 = vmatpush1.bf16.msra.mxu0 %v699
        %731 = vmatprep.subr.bf16.mxu0 %v698
        %732 = vmatpush1.bf16.msra.mxu0 %v697
        %733 = vmatprep.subr.bf16.mxu0 %v696
        %734 = vmatpush1.bf16.msra.mxu0 %v695
        %735 = vmatprep.subr.bf16.mxu0 %v694
        %736 = vmatpush1.bf16.msra.mxu0 %v693
        %737 = vmatprep.subr.bf16.mxu0 %v692
        %738 = vmatpush1.bf16.msra.mxu0 %v691
        %739 = vmatprep.subr.bf16.mxu0 0
        %740 = vmatpush2.bf16.msra.mxu0 0
        %741 = vmatprep.subr.bf16.mxu0 0
        %742 = vmatpush2.bf16.msra.mxu0 0
        %743 = vmatprep.subr.bf16.mxu0 0
        %744 = vmatpush2.bf16.msra.mxu0 0
        %745 = vmatprep.subr.bf16.mxu0 0
        %746 = vmatpush2.bf16.msra.mxu0 0
        %747 = vmatprep.subr.bf16.mxu0 0
        %748 = vmatpush2.bf16.msra.mxu0 0
        %749 = vmatprep.subr.bf16.mxu0 0
        %750 = vmatpush2.bf16.msra.mxu0 0
        %751 = vmatprep.subr.bf16.mxu0 0
        %752 = vmatpush2.bf16.msra.mxu0 0
        %753 = vmatprep.subr.bf16.mxu0 0
        %754 = vmatpush2.bf16.msra.mxu0 0
        %755 = vmatprep.mubr.bf16.mxu0 0
        %756 = vmatmul.mubr.bf16.gmra.mxu0 %v631
        %v757 = vpop.f32.mrf.mxu0
        %v758 = vadd.f32 %v636, %v757
        %v759 = vpop.f32.mrf.mxu0
        %v760 = vadd.f32 %v640, %v759
        %v761 = vpop.f32.mrf.mxu0
        %v762 = vpop.f32.mrf.mxu0
        %763 = vdwg.mxu0
        %v764 = vmax.f32 %v758, 0.0
        %v765 = vxor.u32 %v760, 2147483648
        %v766 = vmul.f32 %v765, 1.442695
        %v767 = vpow.pop %v766
        %v768 = vadd.f32 %v767, 1.0
        %v769 = vrcp.pop %v768
        %v770 = vmul.f32 1.0, %v769
        %v771 = vsub.f32 %v764, %v611
        %v772 = vmul.f32 %v770, %v771
        %v773 = vadd.f32 %v611, %v772
        %s774 = scalar_lea.vmem [#allocation7], 256
        %v775 = vld [vmem:[%s774] sm:$0xff]
        %v776 = vld [vmem:[%s774 + $0x8] sm:$0xff]
        %v777 = vld [vmem:[%s774 + $0x10] sm:$0xff]
        %v778 = vld [vmem:[%s774 + $0x18] sm:$0xff]
        %v779 = vld [vmem:[%s774 + $0x20] sm:$0xff]
        %v780 = vld [vmem:[%s774 + $0x28] sm:$0xff]
        %v781 = vld [vmem:[%s774 + $0x30] sm:$0xff]
        %v782 = vld [vmem:[%s774 + $0x38] sm:$0xff]
        %v783 = vld [vmem:[%s774 + $0x40] sm:$0xff]
        %v784 = vld [vmem:[%s774 + $0x48] sm:$0xff]
        %v785 = vld [vmem:[%s774 + $0x50] sm:$0xff]
        %v786 = vld [vmem:[%s774 + $0x58] sm:$0xff]
        %v787 = vld [vmem:[%s774 + $0x60] sm:$0xff]
        %v788 = vld [vmem:[%s774 + $0x68] sm:$0xff]
        %v789 = vld [vmem:[%s774 + $0x70] sm:$0xff]
        %v790 = vld [vmem:[%s774 + $0x78] sm:$0xff]
        %s791 = scalar_lea.vmem %s4, 4
        %v792 = vld [vmem:[%s791] sm:$0x3]
        %v793 = vpack.c.bf16 %v773, %v773
        %v795 = vlaneseq
        %v796 = vshrl.u32 %v795, 7
        %v797 = vsub.s32 0, %v796
        %v798 = vrot.slane %v792, %v797
        %v799 = vlaneseq
        %v800 = vshrl.u32 %v799, 7
        %v801 = vsub.s32 1, %v800
        %v802 = vrot.slane %v792, %v801
        %v821 = vunpack.c.l.b16 %v775
        %v822 = vunpack.c.h.b16 %v775
        %v823 = vunpack.c.l.b16 %v776
        %v824 = vunpack.c.h.b16 %v776
        %v825 = vunpack.c.l.b16 %v777
        %v826 = vunpack.c.h.b16 %v777
        %v827 = vunpack.c.l.b16 %v778
        %v828 = vunpack.c.h.b16 %v778
        %v829 = vunpack.c.l.b16 %v779
        %v830 = vunpack.c.h.b16 %v779
        %v831 = vunpack.c.l.b16 %v780
        %v832 = vunpack.c.h.b16 %v780
        %v833 = vunpack.c.l.b16 %v781
        %v834 = vunpack.c.h.b16 %v781
        %v835 = vunpack.c.l.b16 %v782
        %v836 = vunpack.c.h.b16 %v782
        %v837 = vunpack.c.l.b16 %v783
        %v838 = vunpack.c.h.b16 %v783
        %v839 = vunpack.c.l.b16 %v784
        %v840 = vunpack.c.h.b16 %v784
        %v841 = vunpack.c.l.b16 %v785
        %v842 = vunpack.c.h.b16 %v785
        %v843 = vunpack.c.l.b16 %v786
        %v844 = vunpack.c.h.b16 %v786
        %v845 = vunpack.c.l.b16 %v787
        %v846 = vunpack.c.h.b16 %v787
        %v847 = vunpack.c.l.b16 %v788
        %v848 = vunpack.c.h.b16 %v788
        %v849 = vunpack.c.l.b16 %v789
        %v850 = vunpack.c.h.b16 %v789
        %v851 = vunpack.c.l.b16 %v790
        %v852 = vunpack.c.h.b16 %v790
        %v853 = vpack.c.b16 %v823, %v821
        %v854 = vpack.c.b16 %v824, %v822
        %v855 = vpack.c.b16 %v827, %v825
        %v856 = vpack.c.b16 %v828, %v826
        %v857 = vpack.c.b16 %v831, %v829
        %v858 = vpack.c.b16 %v832, %v830
        %v859 = vpack.c.b16 %v835, %v833
        %v860 = vpack.c.b16 %v836, %v834
        %v861 = vpack.c.b16 %v839, %v837
        %v862 = vpack.c.b16 %v840, %v838
        %v863 = vpack.c.b16 %v843, %v841
        %v864 = vpack.c.b16 %v844, %v842
        %v865 = vpack.c.b16 %v847, %v845
        %v866 = vpack.c.b16 %v848, %v846
        %v867 = vpack.c.b16 %v851, %v849
        %v868 = vpack.c.b16 %v852, %v850
        %885 = vmatprep.subr.bf16.mxu0 %v868
        %886 = vmatpush1.bf16.msra.mxu0 %v867
        %887 = vmatprep.subr.bf16.mxu0 %v866
        %888 = vmatpush1.bf16.msra.mxu0 %v865
        %889 = vmatprep.subr.bf16.mxu0 %v864
        %890 = vmatpush1.bf16.msra.mxu0 %v863
        %891 = vmatprep.subr.bf16.mxu0 %v862
        %892 = vmatpush1.bf16.msra.mxu0 %v861
        %893 = vmatprep.subr.bf16.mxu0 %v860
        %894 = vmatpush1.bf16.msra.mxu0 %v859
        %895 = vmatprep.subr.bf16.mxu0 %v858
        %896 = vmatpush1.bf16.msra.mxu0 %v857
        %897 = vmatprep.subr.bf16.mxu0 %v856
        %898 = vmatpush1.bf16.msra.mxu0 %v855
        %899 = vmatprep.subr.bf16.mxu0 %v854
        %900 = vmatpush1.bf16.msra.mxu0 %v853
        %901 = vmatprep.subr.bf16.mxu0 0
        %902 = vmatpush2.bf16.msra.mxu0 0
        %903 = vmatprep.subr.bf16.mxu0 0
        %904 = vmatpush2.bf16.msra.mxu0 0
        %905 = vmatprep.subr.bf16.mxu0 0
        %906 = vmatpush2.bf16.msra.mxu0 0
        %907 = vmatprep.subr.bf16.mxu0 0
        %908 = vmatpush2.bf16.msra.mxu0 0
        %909 = vmatprep.subr.bf16.mxu0 0
        %910 = vmatpush2.bf16.msra.mxu0 0
        %911 = vmatprep.subr.bf16.mxu0 0
        %912 = vmatpush2.bf16.msra.mxu0 0
        %913 = vmatprep.subr.bf16.mxu0 0
        %914 = vmatpush2.bf16.msra.mxu0 0
        %915 = vmatprep.subr.bf16.mxu0 0
        %916 = vmatpush2.bf16.msra.mxu0 0
        %917 = vmatprep.mubr.bf16.mxu0 0
        %918 = vmatmul.mubr.bf16.gmra.mxu0 %v793
        %v919 = vpop.f32.mrf.mxu0
        %v920 = vadd.f32 %v798, %v919
        %v921 = vpop.f32.mrf.mxu0
        %v922 = vadd.f32 %v802, %v921
        %v923 = vpop.f32.mrf.mxu0
        %v924 = vpop.f32.mrf.mxu0
        %925 = vdwg.mxu0
        %v926 = vmax.f32 %v920, 0.0
        %v927 = vxor.u32 %v922, 2147483648
        %v928 = vmul.f32 %v927, 1.442695
        %v929 = vpow.pop %v928
        %v930 = vadd.f32 %v929, 1.0
        %v931 = vrcp.pop %v930
        %v932 = vmul.f32 1.0, %v931
        %v933 = vsub.f32 %v926, %v773
        %v934 = vmul.f32 %v932, %v933
        %v935 = vadd.f32 %v773, %v934
        %v936 = vpack.c.bf16 %v935, %v935
        %v937 = vld [vmem:[#allocation8] sm:$0xf]
        %v938 = vld [vmem:[#allocation8 + $0x4] sm:$0xf]
        %v939 = vld [vmem:[#allocation8 + $0x8] sm:$0xf]
        %v940 = vld [vmem:[#allocation8 + $0xc] sm:$0xf]
        %v941 = vld [vmem:[#allocation8 + $0x10] sm:$0xf]
        %v942 = vld [vmem:[#allocation8 + $0x14] sm:$0xf]
        %v943 = vld [vmem:[#allocation8 + $0x18] sm:$0xf]
        %v944 = vld [vmem:[#allocation8 + $0x1c] sm:$0xf]
        %v945 = vld [vmem:[#allocation8 + $0x20] sm:$0xf]
        %v946 = vld [vmem:[#allocation8 + $0x24] sm:$0xf]
        %v947 = vld [vmem:[#allocation8 + $0x28] sm:$0xf]
        %v948 = vld [vmem:[#allocation8 + $0x2c] sm:$0xf]
        %v949 = vld [vmem:[#allocation8 + $0x30] sm:$0xf]
        %v950 = vld [vmem:[#allocation8 + $0x34] sm:$0xf]
        %v951 = vld [vmem:[#allocation8 + $0x38] sm:$0xf]
        %v952 = vld [vmem:[#allocation8 + $0x3c] sm:$0xf]
        %v953 = vld [vmem:[%s6] sm:$0x1]
        %v955 = vlaneseq
        %v956 = vshrl.u32 %v955, 7
        %v957 = vsub.s32 0, %v956
        %v958 = vrot.slane %v953, %v957
        %v976 = vunpack.c.l.b16 %v937
        %v977 = vunpack.c.l.b16 %v938
        %v978 = vunpack.c.l.b16 %v939
        %v979 = vunpack.c.l.b16 %v940
        %v980 = vunpack.c.l.b16 %v941
        %v981 = vunpack.c.l.b16 %v942
        %v982 = vunpack.c.l.b16 %v943
        %v983 = vunpack.c.l.b16 %v944
        %v984 = vunpack.c.l.b16 %v945
        %v985 = vunpack.c.l.b16 %v946
        %v986 = vunpack.c.l.b16 %v947
        %v987 = vunpack.c.l.b16 %v948
        %v988 = vunpack.c.l.b16 %v949
        %v989 = vunpack.c.l.b16 %v950
        %v990 = vunpack.c.l.b16 %v951
        %v991 = vunpack.c.l.b16 %v952
        %v992 = vpack.c.b16 %v977, %v976
        %v993 = vpack.c.b16 %v979, %v978
        %v994 = vpack.c.b16 %v981, %v980
        %v995 = vpack.c.b16 %v983, %v982
        %v996 = vpack.c.b16 %v985, %v984
        %v997 = vpack.c.b16 %v987, %v986
        %v998 = vpack.c.b16 %v989, %v988
        %v999 = vpack.c.b16 %v991, %v990
        %1008 = vmatprep.subr.bf16.mxu0 0
        %1009 = vmatpush1.bf16.msra.mxu0 %v999
        %1010 = vmatprep.subr.bf16.mxu0 0
        %1011 = vmatpush1.bf16.msra.mxu0 %v998
        %1012 = vmatprep.subr.bf16.mxu0 0
        %1013 = vmatpush1.bf16.msra.mxu0 %v997
        %1014 = vmatprep.subr.bf16.mxu0 0
        %1015 = vmatpush1.bf16.msra.mxu0 %v996
        %1016 = vmatprep.subr.bf16.mxu0 0
        %1017 = vmatpush1.bf16.msra.mxu0 %v995
        %1018 = vmatprep.subr.bf16.mxu0 0
        %1019 = vmatpush1.bf16.msra.mxu0 %v994
        %1020 = vmatprep.subr.bf16.mxu0 0
        %1021 = vmatpush1.bf16.msra.mxu0 %v993
        %1022 = vmatprep.subr.bf16.mxu0 0
        %1023 = vmatpush1.bf16.msra.mxu0 %v992
        %1024 = vmatprep.subr.bf16.mxu0 0
        %1025 = vmatpush2.bf16.msra.mxu0 0
        %1026 = vmatprep.subr.bf16.mxu0 0
        %1027 = vmatpush2.bf16.msra.mxu0 0
        %1028 = vmatprep.subr.bf16.mxu0 0
        %1029 = vmatpush2.bf16.msra.mxu0 0
        %1030 = vmatprep.subr.bf16.mxu0 0
        %1031 = vmatpush2.bf16.msra.mxu0 0
        %1032 = vmatprep.subr.bf16.mxu0 0
        %1033 = vmatpush2.bf16.msra.mxu0 0
        %1034 = vmatprep.subr.bf16.mxu0 0
        %1035 = vmatpush2.bf16.msra.mxu0 0
        %1036 = vmatprep.subr.bf16.mxu0 0
        %1037 = vmatpush2.bf16.msra.mxu0 0
        %1038 = vmatprep.subr.bf16.mxu0 0
        %1039 = vmatpush2.bf16.msra.mxu0 0
        %1040 = vmatprep.mubr.bf16.mxu0 0
        %1041 = vmatmul.mubr.bf16.gmra.mxu0 %v936
        %v1042 = vpop.f32.mrf.mxu0
        %v1043 = vadd.f32 %v958, %v1042
        %v1044 = vpop.f32.mrf.mxu0
        %v1045 = vpop.f32.mrf.mxu0
        %v1046 = vpop.f32.mrf.mxu0
        %1047 = vdwg.mxu0
        %1048 = vst [vmem:[%s337] sm:$0xff] %v1043
        %s1049 = sand.u32 %s186, 1
        %s1050 = scalar_lea.sflag [#allocation4], %s1049
        %s1051 = sand.u32 %s186, 1
        %s1052 = smul.addr %s1051, 8
        %s1053 = scalar_lea.vmem [#allocation10], %s1052
        // Predicated region
        $region65: #{tpu_custom_call.1} parent=47 // pred_check
          %p1054 = pneg %p196
        $region66: #{tpu_custom_call.1} parent=47 // pred_check_branch
          %1056 = sbr.rel (%p1054) target = $region68
        $region67: #{tpu_custom_call.1} parent=47 // pred_region
          %s1058 = ssub.s32 128, 128
          %1059 = vsyncadd %s1050, %s1058
          %s1060 = smul.addr %s26, 128
          %s1061 = scalar_lea.hbm %s7, %s1060
          %s1063 = sshll.u32 %s1053, 4
          %s1064 = int_to_ptr.vmem [resolvable:$true] %s1063
          %1066 = dma.vmem_to_hbm [thread:$0]  %s1064, 128, %s1061, %s1050
        $region68: #{tpu_custom_call.1} parent=47 // pred_fallthru
          _
      $region48: #{tpu_custom_call.1} parent=5 // pred_fallthru
        _
      %p1067 = scmp.le.s32.totalorder 2, %s21
      // Predicated region
      $region69: #{tpu_custom_call.1} parent=5 // pred_check
        %p1068 = pneg %p1067
      $region70: #{tpu_custom_call.1} parent=5 // pred_check_branch
        %1070 = sbr.rel (%p1068) target = $region72
      $region71: #{tpu_custom_call.1} parent=5 // pred_region
        %s1071 = ssub.s32 %s21, 2
        // Predicated region
        $region73: #{tpu_custom_call.1} parent=71 // pred_check
          %p1072 = pneg %p202
        $region74: #{tpu_custom_call.1} parent=71 // pred_check_branch
          %1074 = sbr.rel (%p1072) target = $region76
        $region75: #{tpu_custom_call.1} parent=71 // pred_region
          %s1075 = sand.u32 %s187, 1
          %s1076 = scalar_lea.sflag [#allocation4], %s1075
          %s1077 = sand.u32 %s187, 1
          %s1078 = smul.addr %s1077, 8
          %s1079 = scalar_lea.vmem [#allocation10], %s1078
          %1080 = dma.done %s1076, 128
        $region76: #{tpu_custom_call.1} parent=71 // pred_fallthru
          _
      $region72: #{tpu_custom_call.1} parent=5 // pred_fallthru
        _
    $region6: #{tpu_custom_call.1} parent=1 // loop_footer
      %s25 = sadd.s32 1, %s21
    $region7: #{tpu_custom_call.1} parent=1 // loop_footer_branch
      %20 = sbr.rel target = $region3
    $region8: #{tpu_custom_call.1} parent=1 // loop_exit
      _
    %1081 = vsyncpa [#allocation3], 1
    %s1082 = scalar_lea.sflag [#allocation3], 1
    %1083 = vsyncpa %s1082, 1
    %1084 = vsyncpa [#allocation6], 1
    %1085 = vsyncpa [#allocation9], 1
    %1086 = vsyncpa [#allocation4], 1
    %s1087 = scalar_lea.sflag [#allocation4], 1
    %1088 = vsyncpa %s1087, 1

// kernel: tpu_custom_call.1
$region0: #{tpu_custom_call.1}
  #allocation0 [shape = 'u32[]', space=smem, size = 0x4, offset = 0x4, fixed_abs, tag = 'smem constant byte address 0x4 - core index']
  #allocation1 [shape = 'u32[144,128]{1,0:T(1,128)}', space=vmem, size = 0x12000, scoped, tag = 'internal scratch']
  %s0 = inlined_call_operand.hbm [shape: f32[16,128], index: 0, kind: input, shape index: {}]
  %s1 = inlined_call_operand.hbm [shape: bf16[128,128], index: 1, kind: input, shape index: {}]
  %s2 = inlined_call_operand.vmem [shape: f32[1,128], index: 2, kind: input, shape index: {}]
  %s3 = inlined_call_operand.hbm [shape: bf16[3,128,256], index: 3, kind: input, shape index: {}]
  %s4 = inlined_call_operand.vmem [shape: f32[3,1,256], index: 4, kind: input, shape index: {}]
  %s5 = inlined_call_operand.hbm [shape: bf16[128,128], index: 5, kind: input, shape index: {}]
  %s6 = inlined_call_operand.vmem [shape: f32[1,128], index: 6, kind: input, shape index: {}]
  %s7 = inlined_call_operand.hbm [shape: f32[16,128], index: 7, kind: output, shape index: {}]
  %s8 = sld [smem:[#allocation0]]
  $region77: #{tpu_custom_call.1} parent=0
    _
  %s10 = ssub.s32 1, %s8
  %s11 = scalar_select 0, %s10, %s8
  $region1: #{tpu_custom_call.1} parent=0
    #allocation2 [shape = 'u8[8192]{0}', space=vmem, size = 0x2000, scoped, tag = 'input window, operand 0']
    #allocation3 [shape = 's32[2]{0}', space=sflag, size = 0x8, scoped, tag = 'scoped memory for tpu_custom_call.1']
    #allocation4 [shape = 's32[2]{0}', space=sflag, size = 0x8, scoped, tag = 'scoped memory for tpu_custom_call.1']
    #allocation5 [shape = 'u8[32768]{0}', space=vmem, size = 0x8000, scoped, tag = 'input window, operand 1, single buffered']
    #allocation6 [shape = 's32[1]{0}', space=sflag, size = 0x4, scoped, tag = 'scoped memory for tpu_custom_call.1']
    #allocation7 [shape = 'u8[196608]{0}', space=vmem, size = 0x30000, scoped, tag = 'input window, operand 3, single buffered']
    #allocation8 [shape = 'u8[32768]{0}', space=vmem, size = 0x8000, scoped, tag = 'input window, operand 5, single buffered']
    #allocation9 [shape = 's32[1]{0}', space=sflag, size = 0x4, scoped, tag = 'scoped memory for tpu_custom_call.1']
    #allocation10 [shape = 'u8[8192]{0}', space=vmem, size = 0x2000, scoped, tag = 'output window, operand 0']
    %12 = vsyncpa [#allocation3], 0
    %s13 = scalar_lea.sflag [#allocation3], 1
    %14 = vsyncpa %s13, 0
    %15 = vsyncpa [#allocation6], 0
    %16 = vsyncpa [#allocation9], 0
    %17 = vsyncpa [#allocation4], 0
    %s18 = scalar_lea.sflag [#allocation4], 1
    %19 = vsyncpa %s18, 0
    loop: start=0, step=1, limit=4
    $region2: #{tpu_custom_call.1} parent=1 // loop_pre_header
      _
    $region3: #{tpu_custom_call.1} parent=1 // loop_header
      %s21 = sphi 0, %s25
      %p22 = scmp.ge.s32.totalorder %s21, 4
      %s31 = sphi 0, %s33
      %s34 = sphi 0, %s31
      %s35 = sphi 0, %s34
      %s51 = sphi 0, %s35
      %s55 = sphi 0, %s55
      %s57 = sphi 0, %s55
      %s58 = sphi 0, %s57
      %s72 = sphi 0, %s58
      %s76 = sphi 0, %s76
      %s78 = sphi 0, %s76
      %s79 = sphi 0, %s78
      %s93 = sphi 0, %s79
      %s97 = sphi 0, %s97
      %s99 = sphi 0, %s97
      %s100 = sphi 0, %s99
      %s114 = sphi 0, %s100
      %s118 = sphi 0, %s118
      %s120 = sphi 0, %s118
      %s121 = sphi 0, %s120
      %s135 = sphi 0, %s121
      %s139 = sphi 0, %s139
      %s141 = sphi 0, %s139
      %s142 = sphi 0, %s141
      %s156 = sphi 0, %s142
      %s160 = sphi 0, %s160
      %s162 = sphi 0, %s160
      %s163 = sphi 0, %s162
      %s177 = sphi 0, %s163
      %s183 = sphi 0, %s185
      %s186 = sphi 0, %s183
      %s187 = sphi 0, %s186
      %s203 = sphi 0, %s187
    $region4: #{tpu_custom_call.1} parent=1 // loop_header_branch
      %24 = sbr.rel (%p22) target = $region8
    $region5: #{tpu_custom_call.1} parent=1 // loop_body
      %s26 = ssub.s32 %s21, 1
      %s27 = ssub.s32 %s21, 2
      %s28 = sadd.s32 %s21, 1
      %s29 = ssub.s32 %s21, %s28
      %p30 = scmp.eq.s32.totalorder %s29, 0
      %s32 = sadd.s32 %s31, 1
      %s33 = scalar_select %p30, %s31, %s32
      %p36 = pneg %p30
      %p37 = scmp.eq.s32.totalorder %s21, 1
      %p38 = por %p36, %p37
      %p39 = scmp.ne.s32.totalorder %s31, %s34
      %p40 = scmp.eq.s32.totalorder %s21, 0
      %p41 = por %p39, %p40
      %p42 = scmp.ne.s32.totalorder %s31, %s34
      %p43 = scmp.eq.s32.totalorder %s26, 1
      %p44 = por %p42, %p43
      %p45 = scmp.ne.s32.totalorder %s34, %s35
      %p46 = scmp.eq.s32.totalorder %s26, 0
      %p47 = por %p45, %p46
      %p48 = scmp.ne.s32.totalorder %s34, %s35
      %p49 = scmp.eq.s32.totalorder %s27, 1
      %p50 = por %p48, %p49
      %p52 = scmp.ne.s32.totalorder %s35, %s51
      %p53 = scmp.eq.s32.totalorder %s27, 0
      %p54 = por %p52, %p53
      %s56 = sadd.s32 %s55, 1
      %p59 = scmp.eq.s32.totalorder %s21, 1
      %p60 = scmp.ne.s32.totalorder %s55, %s57
      %p61 = scmp.eq.s32.totalorder %s21, 0
      %p62 = por %p60, %p61
      %p63 = scmp.ne.s32.totalorder %s55, %s57
      %p64 = scmp.eq.s32.totalorder %s26, 1
      %p65 = por %p63, %p64
      %p66 = scmp.ne.s32.totalorder %s57, %s58
      %p67 = scmp.eq.s32.totalorder %s26, 0
      %p68 = por %p66, %p67
      %p69 = scmp.ne.s32.totalorder %s57, %s58
      %p70 = scmp.eq.s32.totalorder %s27, 1
      %p71 = por %p69, %p70
      %p73 = scmp.ne.s32.totalorder %s58, %s72
      %p74 = scmp.eq.s32.totalorder %s27, 0
      %p75 = por %p73, %p74
      %s77 = sadd.s32 %s76, 1
      %p80 = scmp.eq.s32.totalorder %s21, 1
      %p81 = scmp.ne.s32.totalorder %s76, %s78
      %p82 = scmp.eq.s32.totalorder %s21, 0
      %p83 = por %p81, %p82
      %p84 = scmp.ne.s32.totalorder %s76, %s78
      %p85 = scmp.eq.s32.totalorder %s26, 1
      %p86 = por %p84, %p85
      %p87 = scmp.ne.s32.totalorder %s78, %s79
      %p88 = scmp.eq.s32.totalorder %s26, 0
      %p89 = por %p87, %p88
      %p90 = scmp.ne.s32.totalorder %s78, %s79
      %p91 = scmp.eq.s32.totalorder %s27, 1
      %p92 = por %p90, %p91
      %p94 = scmp.ne.s32.totalorder %s79, %s93
      %p95 = scmp.eq.s32.totalorder %s27, 0
      %p96 = por %p94, %p95
      %s98 = sadd.s32 %s97, 1
      %p101 = scmp.eq.s32.totalorder %s21, 1
      %p102 = scmp.ne.s32.totalorder %s97, %s99
      %p103 = scmp.eq.s32.totalorder %s21, 0
      %p104 = por %p102, %p103
      %p105 = scmp.ne.s32.totalorder %s97, %s99
      %p106 = scmp.eq.s32.totalorder %s26, 1
      %p107 = por %p105, %p106
      %p108 = scmp.ne.s32.totalorder %s99, %s100
      %p109 = scmp.eq.s32.totalorder %s26, 0
      %p110 = por %p108, %p109
      %p111 = scmp.ne.s32.totalorder %s99, %s100
      %p112 = scmp.eq.s32.totalorder %s27, 1
      %p113 = por %p111, %p112
      %p115 = scmp.ne.s32.totalorder %s100, %s114
      %p116 = scmp.eq.s32.totalorder %s27, 0
      %p117 = por %p115, %p116
      %s119 = sadd.s32 %s118, 1
      %p122 = scmp.eq.s32.totalorder %s21, 1
      %p123 = scmp.ne.s32.totalorder %s118, %s120
      %p124 = scmp.eq.s32.totalorder %s21, 0
      %p125 = por %p123, %p124
      %p126 = scmp.ne.s32.totalorder %s118, %s120
      %p127 = scmp.eq.s32.totalorder %s26, 1
      %p128 = por %p126, %p127
      %p129 = scmp.ne.s32.totalorder %s120, %s121
      %p130 = scmp.eq.s32.totalorder %s26, 0
      %p131 = por %p129, %p130
      %p132 = scmp.ne.s32.totalorder %s120, %s121
      %p133 = scmp.eq.s32.totalorder %s27, 1
      %p134 = por %p132, %p133
      %p136 = scmp.ne.s32.totalorder %s121, %s135
      %p137 = scmp.eq.s32.totalorder %s27, 0
      %p138 = por %p136, %p137
      %s140 = sadd.s32 %s139, 1
      %p143 = scmp.eq.s32.totalorder %s21, 1
      %p144 = scmp.ne.s32.totalorder %s139, %s141
      %p145 = scmp.eq.s32.totalorder %s21, 0
      %p146 = por %p144, %p145
      %p147 = scmp.ne.s32.totalorder %s139, %s141
      %p148 = scmp.eq.s32.totalorder %s26, 1
      %p149 = por %p147, %p148
      %p150 = scmp.ne.s32.totalorder %s141, %s142
      %p151 = scmp.eq.s32.totalorder %s26, 0
      %p152 = por %p150, %p151
      %p153 = scmp.ne.s32.totalorder %s141, %s142
      %p154 = scmp.eq.s32.totalorder %s27, 1
      %p155 = por %p153, %p154
      %p157 = scmp.ne.s32.totalorder %s142, %s156
      %p158 = scmp.eq.s32.totalorder %s27, 0
      %p159 = por %p157, %p158
      %s161 = sadd.s32 %s160, 1
      %p164 = scmp.eq.s32.totalorder %s21, 1
      %p165 = scmp.ne.s32.totalorder %s160, %s162
      %p166 = scmp.eq.s32.totalorder %s21, 0
      %p167 = por %p165, %p166
      %p168 = scmp.ne.s32.totalorder %s160, %s162
      %p169 = scmp.eq.s32.totalorder %s26, 1
      %p170 = por %p168, %p169
      %p171 = scmp.ne.s32.totalorder %s162, %s163
      %p172 = scmp.eq.s32.totalorder %s26, 0
      %p173 = por %p171, %p172
      %p174 = scmp.ne.s32.totalorder %s162, %s163
      %p175 = scmp.eq.s32.totalorder %s27, 1
      %p176 = por %p174, %p175
      %p178 = scmp.ne.s32.totalorder %s163, %s177
      %p179 = scmp.eq.s32.totalorder %s27, 0
      %p180 = por %p178, %p179
      %s181 = ssub.s32 %s21, %s28
      %p182 = scmp.eq.s32.totalorder %s181, 0
      %s184 = sadd.s32 %s183, 1
      %s185 = scalar_select %p182, %s183, %s184
      %p188 = pneg %p182
      %p189 = scmp.eq.s32.totalorder %s21, 1
      %p190 = por %p188, %p189
      %p191 = scmp.ne.s32.totalorder %s183, %s186
      %p192 = scmp.eq.s32.totalorder %s21, 0
      %p193 = por %p191, %p192
      %p194 = scmp.ne.s32.totalorder %s183, %s186
      %p195 = scmp.eq.s32.totalorder %s26, 1
      %p196 = por %p194, %p195
      %p197 = scmp.ne.s32.totalorder %s186, %s187
      %p198 = scmp.eq.s32.totalorder %s26, 0
      %p199 = por %p197, %p198
      %p200 = scmp.ne.s32.totalorder %s186, %s187
      %p201 = scmp.eq.s32.totalorder %s27, 1
      %p202 = por %p200, %p201
      %p204 = scmp.ne.s32.totalorder %s187, %s203
      %p205 = scmp.eq.s32.totalorder %s27, 0
      %p206 = por %p204, %p205
      %p207 = scmp.le.s32.totalorder 1, %s21
      %p208 = scmp.lt.s32.totalorder %s21, 3
      %p209 = pnand %p207, %p208
      %p210 = pneg %p209
      // Predicated region
      $region9: #{tpu_custom_call.1} parent=5 // pred_check
        _
      $region10: #{tpu_custom_call.1} parent=5 // pred_check_branch
        %212 = sbr.rel (%p209) target = $region12
      $region11: #{tpu_custom_call.1} parent=5 // pred_region
        %s213 = ssub.s32 %s21, 1
        // Predicated region
        $region13: #{tpu_custom_call.1} parent=11 // pred_check
          %p214 = pneg %p68
        $region14: #{tpu_custom_call.1} parent=11 // pred_check_branch
          %216 = sbr.rel (%p214) target = $region16
        $region15: #{tpu_custom_call.1} parent=11 // pred_region
          %s218 = ssub.s32 1024, 1024
          %219 = vsyncadd [#allocation6], %s218
          %s220 = sshll.u32 [#allocation5], 4
          %s221 = int_to_ptr.vmem [resolvable:$true] %s220
          %226 = dma.hbm_to_vmem [thread:$0]  %s1, 1024, %s221, [#allocation6], 64, 64, 4
        $region16: #{tpu_custom_call.1} parent=11 // pred_fallthru
          _
        // Predicated region
        $region17: #{tpu_custom_call.1} parent=11 // pred_check
          %p227 = pneg %p89
        $region18: #{tpu_custom_call.1} parent=11 // pred_check_branch
          %229 = sbr.rel (%p227) target = $region20
        $region19: #{tpu_custom_call.1} parent=11 // pred_region
          _
        $region20: #{tpu_custom_call.1} parent=11 // pred_fallthru
          _
        // Predicated region
        $region21: #{tpu_custom_call.1} parent=11 // pred_check
          %p230 = pneg %p110
        $region22: #{tpu_custom_call.1} parent=11 // pred_check_branch
          %232 = sbr.rel (%p230) target = $region24
        $region23: #{tpu_custom_call.1} parent=11 // pred_region
          %s234 = ssub.s32 6144, 6144
          %235 = vsyncadd [#allocation6], %s234
          %s236 = sshll.u32 [#allocation7], 4
          %s237 = int_to_ptr.vmem [resolvable:$true] %s236
          %242 = dma.hbm_to_vmem [thread:$0]  %s3, 6144, %s237, [#allocation6], 128, 128, 8
        $region24: #{tpu_custom_call.1} parent=11 // pred_fallthru
          _
        // Predicated region
        $region25: #{tpu_custom_call.1} parent=11 // pred_check
          %p243 = pneg %p131
        $region26: #{tpu_custom_call.1} parent=11 // pred_check_branch
          %245 = sbr.rel (%p243) target = $region28
        $region27: #{tpu_custom_call.1} parent=11 // pred_region
          _
        $region28: #{tpu_custom_call.1} parent=11 // pred_fallthru
          _
        // Predicated region
        $region29: #{tpu_custom_call.1} parent=11 // pred_check
          %p246 = pneg %p152
        $region30: #{tpu_custom_call.1} parent=11 // pred_check_branch
          %248 = sbr.rel (%p246) target = $region32
        $region31: #{tpu_custom_call.1} parent=11 // pred_region
          %s250 = ssub.s32 1024, 1024
          %251 = vsyncadd [#allocation9], %s250
          %s252 = sshll.u32 [#allocation8], 4
          %s253 = int_to_ptr.vmem [resolvable:$true] %s252
          %258 = dma.hbm_to_vmem [thread:$0]  %s5, 1024, %s253, [#allocation9], 64, 64, 4
        $region32: #{tpu_custom_call.1} parent=11 // pred_fallthru
          _
        // Predicated region
        $region33: #{tpu_custom_call.1} parent=11 // pred_check
          %p259 = pneg %p173
        $region34: #{tpu_custom_call.1} parent=11 // pred_check_branch
          %261 = sbr.rel (%p259) target = $region36
        $region35: #{tpu_custom_call.1} parent=11 // pred_region
          _
        $region36: #{tpu_custom_call.1} parent=11 // pred_fallthru
          _
      $region12: #{tpu_custom_call.1} parent=5 // pred_fallthru
        _
      %p262 = scmp.lt.s32.totalorder %s21, 2
      // Predicated region
      $region37: #{tpu_custom_call.1} parent=5 // pred_check
        %p263 = pneg %p262
      $region38: #{tpu_custom_call.1} parent=5 // pred_check_branch
        %265 = sbr.rel (%p263) target = $region40
      $region39: #{tpu_custom_call.1} parent=5 // pred_region
        // Predicated region
        $region41: #{tpu_custom_call.1} parent=39 // pred_check
          %p266 = pneg %p41
        $region42: #{tpu_custom_call.1} parent=39 // pred_check_branch
          %268 = sbr.rel (%p266) target = $region44
        $region43: #{tpu_custom_call.1} parent=39 // pred_region
          %s269 = sand.u32 %s31, 1
          %s270 = scalar_lea.sflag [#allocation3], %s269
          %s271 = sand.u32 %s31, 1
          %s272 = smul.addr %s271, 8
          %s273 = scalar_lea.vmem [#allocation2], %s272
          %s275 = ssub.s32 128, 128
          %276 = vsyncadd %s270, %s275
          %s277 = smul.addr %s21, 128
          %s278 = scalar_lea.hbm %s0, %s277
          %s280 = sshll.u32 %s273, 4
          %s281 = int_to_ptr.vmem [resolvable:$true] %s280
          %283 = dma.hbm_to_vmem [thread:$0]  %s278, 128, %s281, %s270
        $region44: #{tpu_custom_call.1} parent=39 // pred_fallthru
          _
      $region40: #{tpu_custom_call.1} parent=5 // pred_fallthru
        _
      %p284 = scmp.le.s32.totalorder 1, %s21
      %p285 = scmp.lt.s32.totalorder %s21, 3
      %p286 = pnand %p284, %p285
      %p287 = pneg %p286
      // Predicated region
      $region45: #{tpu_custom_call.1} parent=5 // pred_check
        _
      $region46: #{tpu_custom_call.1} parent=5 // pred_check_branch
        %289 = sbr.rel (%p286) target = $region48
      $region47: #{tpu_custom_call.1} parent=5 // pred_region
        %s290 = ssub.s32 %s21, 1
        %s291 = sand.u32 %s34, 1
        %s292 = scalar_lea.sflag [#allocation3], %s291
        %s293 = sand.u32 %s34, 1
        %s294 = smul.addr %s293, 8
        %s295 = scalar_lea.vmem [#allocation2], %s294
        // Predicated region
        $region49: #{tpu_custom_call.1} parent=47 // pred_check
          %p296 = pneg %p47
        $region50: #{tpu_custom_call.1} parent=47 // pred_check_branch
          %298 = sbr.rel (%p296) target = $region52
        $region51: #{tpu_custom_call.1} parent=47 // pred_region
          %299 = dma.done %s292, 128
        $region52: #{tpu_custom_call.1} parent=47 // pred_fallthru
          _
        // Predicated region
        $region53: #{tpu_custom_call.1} parent=47 // pred_check
          %p300 = pneg %p68
        $region54: #{tpu_custom_call.1} parent=47 // pred_check_branch
          %302 = sbr.rel (%p300) target = $region56
        $region55: #{tpu_custom_call.1} parent=47 // pred_region
          %303 = dma.done [#allocation6], 1024
        $region56: #{tpu_custom_call.1} parent=47 // pred_fallthru
          _
        // Predicated region
        $region57: #{tpu_custom_call.1} parent=47 // pred_check
          %p304 = pneg %p110
        $region58: #{tpu_custom_call.1} parent=47 // pred_check_branch
          %306 = sbr.rel (%p304) target = $region60
        $region59: #{tpu_custom_call.1} parent=47 // pred_region
          %307 = dma.done [#allocation6], 6144
        $region60: #{tpu_custom_call.1} parent=47 // pred_fallthru
          _
        // Predicated region
        $region61: #{tpu_custom_call.1} parent=47 // pred_check
          %p308 = pneg %p152
        $region62: #{tpu_custom_call.1} parent=47 // pred_check_branch
          %310 = sbr.rel (%p308) target = $region64
        $region63: #{tpu_custom_call.1} parent=47 // pred_region
          %311 = dma.done [#allocation9], 1024
        $region64: #{tpu_custom_call.1} parent=47 // pred_fallthru
          _
        %s312 = sand.u32 %s34, 1
        %s313 = scalar_lea.sflag [#allocation3], %s312
        %s314 = sand.u32 %s34, 1
        %s315 = smul.addr %s314, 8
        %s316 = scalar_lea.vmem [#allocation2], %s315
        %p317 = pneg %p47
        %p318 = pneg %p44
        %p319 = pneg %p68
        %p320 = pneg %p65
        %p321 = pneg %p89
        %p322 = pneg %p86
        %p323 = pneg %p110
        %p324 = pneg %p107
        %p325 = pneg %p131
        %p326 = pneg %p128
        %p327 = pneg %p152
        %p328 = pneg %p149
        %p329 = pneg %p173
        %p330 = pneg %p170
        %p331 = pneg %p199
        %p332 = pneg %p196
        %s333 = sand.u32 %s186, 1
        %s334 = scalar_lea.sflag [#allocation4], %s333
        %s335 = sand.u32 %s186, 1
        %s336 = smul.addr %s335, 8
        %s337 = scalar_lea.vmem [#allocation10], %s336
        %v339 = vld [vmem:[%s295] sm:$0xff]
        %v340 = vpack.c.bf16 %v339, %v339
        %v341 = vld [vmem:[#allocation5] sm:$0xf]
        %v342 = vld [vmem:[#allocation5 + $0x4] sm:$0xf]
        %v343 = vld [vmem:[#allocation5 + $0x8] sm:$0xf]
        %v344 = vld [vmem:[#allocation5 + $0xc] sm:$0xf]
        %v345 = vld [vmem:[#allocation5 + $0x10] sm:$0xf]
        %v346 = vld [vmem:[#allocation5 + $0x14] sm:$0xf]
        %v347 = vld [vmem:[#allocation5 + $0x18] sm:$0xf]
        %v348 = vld [vmem:[#allocation5 + $0x1c] sm:$0xf]
        %v349 = vld [vmem:[#allocation5 + $0x20] sm:$0xf]
        %v350 = vld [vmem:[#allocation5 + $0x24] sm:$0xf]
        %v351 = vld [vmem:[#allocation5 + $0x28] sm:$0xf]
        %v352 = vld [vmem:[#allocation5 + $0x2c] sm:$0xf]
        %v353 = vld [vmem:[#allocation5 + $0x30] sm:$0xf]
        %v354 = vld [vmem:[#allocation5 + $0x34] sm:$0xf]
        %v355 = vld [vmem:[#allocation5 + $0x38] sm:$0xf]
        %v356 = vld [vmem:[#allocation5 + $0x3c] sm:$0xf]
        %v357 = vld [vmem:[%s2] sm:$0x1]
        %v359 = vlaneseq
        %v360 = vshrl.u32 %v359, 7
        %v361 = vsub.s32 0, %v360
        %v362 = vrot.slane %v357, %v361
        %v380 = vunpack.c.l.b16 %v341
        %v381 = vunpack.c.l.b16 %v342
        %v382 = vunpack.c.l.b16 %v343
        %v383 = vunpack.c.l.b16 %v344
        %v384 = vunpack.c.l.b16 %v345
        %v385 = vunpack.c.l.b16 %v346
        %v386 = vunpack.c.l.b16 %v347
        %v387 = vunpack.c.l.b16 %v348
        %v388 = vunpack.c.l.b16 %v349
        %v389 = vunpack.c.l.b16 %v350
        %v390 = vunpack.c.l.b16 %v351
        %v391 = vunpack.c.l.b16 %v352
        %v392 = vunpack.c.l.b16 %v353
        %v393 = vunpack.c.l.b16 %v354
        %v394 = vunpack.c.l.b16 %v355
        %v395 = vunpack.c.l.b16 %v356
        %v396 = vpack.c.b16 %v381, %v380
        %v397 = vpack.c.b16 %v383, %v382
        %v398 = vpack.c.b16 %v385, %v384
        %v399 = vpack.c.b16 %v387, %v386
        %v400 = vpack.c.b16 %v389, %v388
        %v401 = vpack.c.b16 %v391, %v390
        %v402 = vpack.c.b16 %v393, %v392
        %v403 = vpack.c.b16 %v395, %v394
        %412 = vmatprep.subr.bf16.mxu0 0
        %413 = vmatpush1.bf16.msra.mxu0 %v403
        %414 = vmatprep.subr.bf16.mxu0 0
        %415 = vmatpush1.bf16.msra.mxu0 %v402
        %416 = vmatprep.subr.bf16.mxu0 0
        %417 = vmatpush1.bf16.msra.mxu0 %v401
        %418 = vmatprep.subr.bf16.mxu0 0
        %419 = vmatpush1.bf16.msra.mxu0 %v400
        %420 = vmatprep.subr.bf16.mxu0 0
        %421 = vmatpush1.bf16.msra.mxu0 %v399
        %422 = vmatprep.subr.bf16.mxu0 0
        %423 = vmatpush1.bf16.msra.mxu0 %v398
        %424 = vmatprep.subr.bf16.mxu0 0
        %425 = vmatpush1.bf16.msra.mxu0 %v397
        %426 = vmatprep.subr.bf16.mxu0 0
        %427 = vmatpush1.bf16.msra.mxu0 %v396
        %428 = vmatprep.subr.bf16.mxu0 0
        %429 = vmatpush2.bf16.msra.mxu0 0
        %430 = vmatprep.subr.bf16.mxu0 0
        %431 = vmatpush2.bf16.msra.mxu0 0
        %432 = vmatprep.subr.bf16.mxu0 0
        %433 = vmatpush2.bf16.msra.mxu0 0
        %434 = vmatprep.subr.bf16.mxu0 0
        %435 = vmatpush2.bf16.msra.mxu0 0
        %436 = vmatprep.subr.bf16.mxu0 0
        %437 = vmatpush2.bf16.msra.mxu0 0
        %438 = vmatprep.subr.bf16.mxu0 0
        %439 = vmatpush2.bf16.msra.mxu0 0
        %440 = vmatprep.subr.bf16.mxu0 0
        %441 = vmatpush2.bf16.msra.mxu0 0
        %442 = vmatprep.subr.bf16.mxu0 0
        %443 = vmatpush2.bf16.msra.mxu0 0
        %444 = vmatprep.mubr.bf16.mxu0 0
        %445 = vmatmul.mubr.bf16.gmra.mxu0 %v340
        %v446 = vpop.f32.mrf.mxu0
        %v447 = vadd.f32 %v362, %v446
        %v448 = vpop.f32.mrf.mxu0
        %v449 = vpop.f32.mrf.mxu0
        %v450 = vpop.f32.mrf.mxu0
        %451 = vdwg.mxu0
        %v452 = vld [vmem:[#allocation7] sm:$0xff]
        %v453 = vld [vmem:[#allocation7 + $0x8] sm:$0xff]
        %v454 = vld [vmem:[#allocation7 + $0x10] sm:$0xff]
        %v455 = vld [vmem:[#allocation7 + $0x18] sm:$0xff]
        %v456 = vld [vmem:[#allocation7 + $0x20] sm:$0xff]
        %v457 = vld [vmem:[#allocation7 + $0x28] sm:$0xff]
        %v458 = vld [vmem:[#allocation7 + $0x30] sm:$0xff]
        %v459 = vld [vmem:[#allocation7 + $0x38] sm:$0xff]
        %v460 = vld [vmem:[#allocation7 + $0x40] sm:$0xff]
        %v461 = vld [vmem:[#allocation7 + $0x48] sm:$0xff]
        %v462 = vld [vmem:[#allocation7 + $0x50] sm:$0xff]
        %v463 = vld [vmem:[#allocation7 + $0x58] sm:$0xff]
        %v464 = vld [vmem:[#allocation7 + $0x60] sm:$0xff]
        %v465 = vld [vmem:[#allocation7 + $0x68] sm:$0xff]
        %v466 = vld [vmem:[#allocation7 + $0x70] sm:$0xff]
        %v467 = vld [vmem:[#allocation7 + $0x78] sm:$0xff]
        %v468 = vld [vmem:[%s4] sm:$0x3]
        %v469 = vpack.c.bf16 %v447, %v447
        %v471 = vlaneseq
        %v472 = vshrl.u32 %v471, 7
        %v473 = vsub.s32 0, %v472
        %v474 = vrot.slane %v468, %v473
        %v475 = vlaneseq
        %v476 = vshrl.u32 %v475, 7
        %v477 = vsub.s32 1, %v476
        %v478 = vrot.slane %v468, %v477
        %v497 = vunpack.c.l.b16 %v452
        %v498 = vunpack.c.h.b16 %v452
        %v499 = vunpack.c.l.b16 %v453
        %v500 = vunpack.c.h.b16 %v453
        %v501 = vunpack.c.l.b16 %v454
        %v502 = vunpack.c.h.b16 %v454
        %v503 = vunpack.c.l.b16 %v455
        %v504 = vunpack.c.h.b16 %v455
        %v505 = vunpack.c.l.b16 %v456
        %v506 = vunpack.c.h.b16 %v456
        %v507 = vunpack.c.l.b16 %v457
        %v508 = vunpack.c.h.b16 %v457
        %v509 = vunpack.c.l.b16 %v458
        %v510 = vunpack.c.h.b16 %v458
        %v511 = vunpack.c.l.b16 %v459
        %v512 = vunpack.c.h.b16 %v459
        %v513 = vunpack.c.l.b16 %v460
        %v514 = vunpack.c.h.b16 %v460
        %v515 = vunpack.c.l.b16 %v461
        %v516 = vunpack.c.h.b16 %v461
        %v517 = vunpack.c.l.b16 %v462
        %v518 = vunpack.c.h.b16 %v462
        %v519 = vunpack.c.l.b16 %v463
        %v520 = vunpack.c.h.b16 %v463
        %v521 = vunpack.c.l.b16 %v464
        %v522 = vunpack.c.h.b16 %v464
        %v523 = vunpack.c.l.b16 %v465
        %v524 = vunpack.c.h.b16 %v465
        %v525 = vunpack.c.l.b16 %v466
        %v526 = vunpack.c.h.b16 %v466
        %v527 = vunpack.c.l.b16 %v467
        %v528 = vunpack.c.h.b16 %v467
        %v529 = vpack.c.b16 %v499, %v497
        %v530 = vpack.c.b16 %v500, %v498
        %v531 = vpack.c.b16 %v503, %v501
        %v532 = vpack.c.b16 %v504, %v502
        %v533 = vpack.c.b16 %v507, %v505
        %v534 = vpack.c.b16 %v508, %v506
        %v535 = vpack.c.b16 %v511, %v509
        %v536 = vpack.c.b16 %v512, %v510
        %v537 = vpack.c.b16 %v515, %v513
        %v538 = vpack.c.b16 %v516, %v514
        %v539 = vpack.c.b16 %v519, %v517
        %v540 = vpack.c.b16 %v520, %v518
        %v541 = vpack.c.b16 %v523, %v521
        %v542 = vpack.c.b16 %v524, %v522
        %v543 = vpack.c.b16 %v527, %v525
        %v544 = vpack.c.b16 %v528, %v526
        %561 = vmatprep.subr.bf16.mxu0 %v544
        %562 = vmatpush1.bf16.msra.mxu0 %v543
        %563 = vmatprep.subr.bf16.mxu0 %v542
        %564 = vmatpush1.bf16.msra.mxu0 %v541
        %565 = vmatprep.subr.bf16.mxu0 %v540
        %566 = vmatpush1.bf16.msra.mxu0 %v539
        %567 = vmatprep.subr.bf16.mxu0 %v538
        %568 = vmatpush1.bf16.msra.mxu0 %v537
        %569 = vmatprep.subr.bf16.mxu0 %v536
        %570 = vmatpush1.bf16.msra.mxu0 %v535
        %571 = vmatprep.subr.bf16.mxu0 %v534
        %572 = vmatpush1.bf16.msra.mxu0 %v533
        %573 = vmatprep.subr.bf16.mxu0 %v532
        %574 = vmatpush1.bf16.msra.mxu0 %v531
        %575 = vmatprep.subr.bf16.mxu0 %v530
        %576 = vmatpush1.bf16.msra.mxu0 %v529
        %577 = vmatprep.subr.bf16.mxu0 0
        %578 = vmatpush2.bf16.msra.mxu0 0
        %579 = vmatprep.subr.bf16.mxu0 0
        %580 = vmatpush2.bf16.msra.mxu0 0
        %581 = vmatprep.subr.bf16.mxu0 0
        %582 = vmatpush2.bf16.msra.mxu0 0
        %583 = vmatprep.subr.bf16.mxu0 0
        %584 = vmatpush2.bf16.msra.mxu0 0
        %585 = vmatprep.subr.bf16.mxu0 0
        %586 = vmatpush2.bf16.msra.mxu0 0
        %587 = vmatprep.subr.bf16.mxu0 0
        %588 = vmatpush2.bf16.msra.mxu0 0
        %589 = vmatprep.subr.bf16.mxu0 0
        %590 = vmatpush2.bf16.msra.mxu0 0
        %591 = vmatprep.subr.bf16.mxu0 0
        %592 = vmatpush2.bf16.msra.mxu0 0
        %593 = vmatprep.mubr.bf16.mxu0 0
        %594 = vmatmul.mubr.bf16.gmra.mxu0 %v469
        %v595 = vpop.f32.mrf.mxu0
        %v596 = vadd.f32 %v474, %v595
        %v597 = vpop.f32.mrf.mxu0
        %v598 = vadd.f32 %v478, %v597
        %v599 = vpop.f32.mrf.mxu0
        %v600 = vpop.f32.mrf.mxu0
        %601 = vdwg.mxu0
        %v602 = vmax.f32 %v596, 0.0
        %v603 = vxor.u32 %v598, 2147483648
        %v604 = vmul.f32 %v603, 1.442695
        %v605 = vpow.pop %v604
        %v606 = vadd.f32 %v605, 1.0
        %v607 = vrcp.pop %v606
        %v608 = vmul.f32 1.0, %v607
        %v609 = vsub.f32 %v602, %v447
        %v610 = vmul.f32 %v608, %v609
        %v611 = vadd.f32 %v447, %v610
        %s612 = scalar_lea.vmem [#allocation7], 128
        %v613 = vld [vmem:[%s612] sm:$0xff]
        %v614 = vld [vmem:[%s612 + $0x8] sm:$0xff]
        %v615 = vld [vmem:[%s612 + $0x10] sm:$0xff]
        %v616 = vld [vmem:[%s612 + $0x18] sm:$0xff]
        %v617 = vld [vmem:[%s612 + $0x20] sm:$0xff]
        %v618 = vld [vmem:[%s612 + $0x28] sm:$0xff]
        %v619 = vld [vmem:[%s612 + $0x30] sm:$0xff]
        %v620 = vld [vmem:[%s612 + $0x38] sm:$0xff]
        %v621 = vld [vmem:[%s612 + $0x40] sm:$0xff]
        %v622 = vld [vmem:[%s612 + $0x48] sm:$0xff]
        %v623 = vld [vmem:[%s612 + $0x50] sm:$0xff]
        %v624 = vld [vmem:[%s612 + $0x58] sm:$0xff]
        %v625 = vld [vmem:[%s612 + $0x60] sm:$0xff]
        %v626 = vld [vmem:[%s612 + $0x68] sm:$0xff]
        %v627 = vld [vmem:[%s612 + $0x70] sm:$0xff]
        %v628 = vld [vmem:[%s612 + $0x78] sm:$0xff]
        %s629 = scalar_lea.vmem %s4, 2
        %v630 = vld [vmem:[%s629] sm:$0x3]
        %v631 = vpack.c.bf16 %v611, %v611
        %v633 = vlaneseq
        %v634 = vshrl.u32 %v633, 7
        %v635 = vsub.s32 0, %v634
        %v636 = vrot.slane %v630, %v635
        %v637 = vlaneseq
        %v638 = vshrl.u32 %v637, 7
        %v639 = vsub.s32 1, %v638
        %v640 = vrot.slane %v630, %v639
        %v659 = vunpack.c.l.b16 %v613
        %v660 = vunpack.c.h.b16 %v613
        %v661 = vunpack.c.l.b16 %v614
        %v662 = vunpack.c.h.b16 %v614
        %v663 = vunpack.c.l.b16 %v615
        %v664 = vunpack.c.h.b16 %v615
        %v665 = vunpack.c.l.b16 %v616
        %v666 = vunpack.c.h.b16 %v616
        %v667 = vunpack.c.l.b16 %v617
        %v668 = vunpack.c.h.b16 %v617
        %v669 = vunpack.c.l.b16 %v618
        %v670 = vunpack.c.h.b16 %v618
        %v671 = vunpack.c.l.b16 %v619
        %v672 = vunpack.c.h.b16 %v619
        %v673 = vunpack.c.l.b16 %v620
        %v674 = vunpack.c.h.b16 %v620
        %v675 = vunpack.c.l.b16 %v621
        %v676 = vunpack.c.h.b16 %v621
        %v677 = vunpack.c.l.b16 %v622
        %v678 = vunpack.c.h.b16 %v622
        %v679 = vunpack.c.l.b16 %v623
        %v680 = vunpack.c.h.b16 %v623
        %v681 = vunpack.c.l.b16 %v624
        %v682 = vunpack.c.h.b16 %v624
        %v683 = vunpack.c.l.b16 %v625
        %v684 = vunpack.c.h.b16 %v625
        %v685 = vunpack.c.l.b16 %v626
        %v686 = vunpack.c.h.b16 %v626
        %v687 = vunpack.c.l.b16 %v627
        %v688 = vunpack.c.h.b16 %v627
        %v689 = vunpack.c.l.b16 %v628
        %v690 = vunpack.c.h.b16 %v628
        %v691 = vpack.c.b16 %v661, %v659
        %v692 = vpack.c.b16 %v662, %v660
        %v693 = vpack.c.b16 %v665, %v663
        %v694 = vpack.c.b16 %v666, %v664
        %v695 = vpack.c.b16 %v669, %v667
        %v696 = vpack.c.b16 %v670, %v668
        %v697 = vpack.c.b16 %v673, %v671
        %v698 = vpack.c.b16 %v674, %v672
        %v699 = vpack.c.b16 %v677, %v675
        %v700 = vpack.c.b16 %v678, %v676
        %v701 = vpack.c.b16 %v681, %v679
        %v702 = vpack.c.b16 %v682, %v680
        %v703 = vpack.c.b16 %v685, %v683
        %v704 = vpack.c.b16 %v686, %v684
        %v705 = vpack.c.b16 %v689, %v687
        %v706 = vpack.c.b16 %v690, %v688
        %723 = vmatprep.subr.bf16.mxu0 %v706
        %724 = vmatpush1.bf16.msra.mxu0 %v705
        %725 = vmatprep.subr.bf16.mxu0 %v704
        %726 = vmatpush1.bf16.msra.mxu0 %v703
        %727 = vmatprep.subr.bf16.mxu0 %v702
        %728 = vmatpush1.bf16.msra.mxu0 %v701
        %729 = vmatprep.subr.bf16.mxu0 %v700
        %730 = vmatpush1.bf16.msra.mxu0 %v699
        %731 = vmatprep.subr.bf16.mxu0 %v698
        %732 = vmatpush1.bf16.msra.mxu0 %v697
        %733 = vmatprep.subr.bf16.mxu0 %v696
        %734 = vmatpush1.bf16.msra.mxu0 %v695
        %735 = vmatprep.subr.bf16.mxu0 %v694
        %736 = vmatpush1.bf16.msra.mxu0 %v693
        %737 = vmatprep.subr.bf16.mxu0 %v692
        %738 = vmatpush1.bf16.msra.mxu0 %v691
        %739 = vmatprep.subr.bf16.mxu0 0
        %740 = vmatpush2.bf16.msra.mxu0 0
        %741 = vmatprep.subr.bf16.mxu0 0
        %742 = vmatpush2.bf16.msra.mxu0 0
        %743 = vmatprep.subr.bf16.mxu0 0
        %744 = vmatpush2.bf16.msra.mxu0 0
        %745 = vmatprep.subr.bf16.mxu0 0
        %746 = vmatpush2.bf16.msra.mxu0 0
        %747 = vmatprep.subr.bf16.mxu0 0
        %748 = vmatpush2.bf16.msra.mxu0 0
        %749 = vmatprep.subr.bf16.mxu0 0
        %750 = vmatpush2.bf16.msra.mxu0 0
        %751 = vmatprep.subr.bf16.mxu0 0
        %752 = vmatpush2.bf16.msra.mxu0 0
        %753 = vmatprep.subr.bf16.mxu0 0
        %754 = vmatpush2.bf16.msra.mxu0 0
        %755 = vmatprep.mubr.bf16.mxu0 0
        %756 = vmatmul.mubr.bf16.gmra.mxu0 %v631
        %v757 = vpop.f32.mrf.mxu0
        %v758 = vadd.f32 %v636, %v757
        %v759 = vpop.f32.mrf.mxu0
        %v760 = vadd.f32 %v640, %v759
        %v761 = vpop.f32.mrf.mxu0
        %v762 = vpop.f32.mrf.mxu0
        %763 = vdwg.mxu0
        %v764 = vmax.f32 %v758, 0.0
        %v765 = vxor.u32 %v760, 2147483648
        %v766 = vmul.f32 %v765, 1.442695
        %v767 = vpow.pop %v766
        %v768 = vadd.f32 %v767, 1.0
        %v769 = vrcp.pop %v768
        %v770 = vmul.f32 1.0, %v769
        %v771 = vsub.f32 %v764, %v611
        %v772 = vmul.f32 %v770, %v771
        %v773 = vadd.f32 %v611, %v772
        %s774 = scalar_lea.vmem [#allocation7], 256
        %v775 = vld [vmem:[%s774] sm:$0xff]
        %v776 = vld [vmem:[%s774 + $0x8] sm:$0xff]
        %v777 = vld [vmem:[%s774 + $0x10] sm:$0xff]
        %v778 = vld [vmem:[%s774 + $0x18] sm:$0xff]
        %v779 = vld [vmem:[%s774 + $0x20] sm:$0xff]
        %v780 = vld [vmem:[%s774 + $0x28] sm:$0xff]
        %v781 = vld [vmem:[%s774 + $0x30] sm:$0xff]
        %v782 = vld [vmem:[%s774 + $0x38] sm:$0xff]
        %v783 = vld [vmem:[%s774 + $0x40] sm:$0xff]
        %v784 = vld [vmem:[%s774 + $0x48] sm:$0xff]
        %v785 = vld [vmem:[%s774 + $0x50] sm:$0xff]
        %v786 = vld [vmem:[%s774 + $0x58] sm:$0xff]
        %v787 = vld [vmem:[%s774 + $0x60] sm:$0xff]
        %v788 = vld [vmem:[%s774 + $0x68] sm:$0xff]
        %v789 = vld [vmem:[%s774 + $0x70] sm:$0xff]
        %v790 = vld [vmem:[%s774 + $0x78] sm:$0xff]
        %s791 = scalar_lea.vmem %s4, 4
        %v792 = vld [vmem:[%s791] sm:$0x3]
        %v793 = vpack.c.bf16 %v773, %v773
        %v795 = vlaneseq
        %v796 = vshrl.u32 %v795, 7
        %v797 = vsub.s32 0, %v796
        %v798 = vrot.slane %v792, %v797
        %v799 = vlaneseq
        %v800 = vshrl.u32 %v799, 7
        %v801 = vsub.s32 1, %v800
        %v802 = vrot.slane %v792, %v801
        %v821 = vunpack.c.l.b16 %v775
        %v822 = vunpack.c.h.b16 %v775
        %v823 = vunpack.c.l.b16 %v776
        %v824 = vunpack.c.h.b16 %v776
        %v825 = vunpack.c.l.b16 %v777
        %v826 = vunpack.c.h.b16 %v777
        %v827 = vunpack.c.l.b16 %v778
        %v828 = vunpack.c.h.b16 %v778
        %v829 = vunpack.c.l.b16 %v779
        %v830 = vunpack.c.h.b16 %v779
        %v831 = vunpack.c.l.b16 %v780
        %v832 = vunpack.c.h.b16 %v780
        %v833 = vunpack.c.l.b16 %v781
        %v834 = vunpack.c.h.b16 %v781
        %v835 = vunpack.c.l.b16 %v782
        %v836 = vunpack.c.h.b16 %v782
        %v837 = vunpack.c.l.b16 %v783
        %v838 = vunpack.c.h.b16 %v783
        %v839 = vunpack.c.l.b16 %v784
        %v840 = vunpack.c.h.b16 %v784
        %v841 = vunpack.c.l.b16 %v785
        %v842 = vunpack.c.h.b16 %v785
        %v843 = vunpack.c.l.b16 %v786
        %v844 = vunpack.c.h.b16 %v786
        %v845 = vunpack.c.l.b16 %v787
        %v846 = vunpack.c.h.b16 %v787
        %v847 = vunpack.c.l.b16 %v788
        %v848 = vunpack.c.h.b16 %v788
        %v849 = vunpack.c.l.b16 %v789
        %v850 = vunpack.c.h.b16 %v789
        %v851 = vunpack.c.l.b16 %v790
        %v852 = vunpack.c.h.b16 %v790
        %v853 = vpack.c.b16 %v823, %v821
        %v854 = vpack.c.b16 %v824, %v822
        %v855 = vpack.c.b16 %v827, %v825
        %v856 = vpack.c.b16 %v828, %v826
        %v857 = vpack.c.b16 %v831, %v829
        %v858 = vpack.c.b16 %v832, %v830
        %v859 = vpack.c.b16 %v835, %v833
        %v860 = vpack.c.b16 %v836, %v834
        %v861 = vpack.c.b16 %v839, %v837
        %v862 = vpack.c.b16 %v840, %v838
        %v863 = vpack.c.b16 %v843, %v841
        %v864 = vpack.c.b16 %v844, %v842
        %v865 = vpack.c.b16 %v847, %v845
        %v866 = vpack.c.b16 %v848, %v846
        %v867 = vpack.c.b16 %v851, %v849
        %v868 = vpack.c.b16 %v852, %v850
        %885 = vmatprep.subr.bf16.mxu0 %v868
        %886 = vmatpush1.bf16.msra.mxu0 %v867
        %887 = vmatprep.subr.bf16.mxu0 %v866
        %888 = vmatpush1.bf16.msra.mxu0 %v865
        %889 = vmatprep.subr.bf16.mxu0 %v864
        %890 = vmatpush1.bf16.msra.mxu0 %v863
        %891 = vmatprep.subr.bf16.mxu0 %v862
        %892 = vmatpush1.bf16.msra.mxu0 %v861
        %893 = vmatprep.subr.bf16.mxu0 %v860
        %894 = vmatpush1.bf16.msra.mxu0 %v859
        %895 = vmatprep.subr.bf16.mxu0 %v858
        %896 = vmatpush1.bf16.msra.mxu0 %v857
        %897 = vmatprep.subr.bf16.mxu0 %v856
        %898 = vmatpush1.bf16.msra.mxu0 %v855
        %899 = vmatprep.subr.bf16.mxu0 %v854
        %900 = vmatpush1.bf16.msra.mxu0 %v853
        %901 = vmatprep.subr.bf16.mxu0 0
        %902 = vmatpush2.bf16.msra.mxu0 0
        %903 = vmatprep.subr.bf16.mxu0 0
        %904 = vmatpush2.bf16.msra.mxu0 0
        %905 = vmatprep.subr.bf16.mxu0 0
        %906 = vmatpush2.bf16.msra.mxu0 0
        %907 = vmatprep.subr.bf16.mxu0 0
        %908 = vmatpush2.bf16.msra.mxu0 0
        %909 = vmatprep.subr.bf16.mxu0 0
        %910 = vmatpush2.bf16.msra.mxu0 0
        %911 = vmatprep.subr.bf16.mxu0 0
        %912 = vmatpush2.bf16.msra.mxu0 0
        %913 = vmatprep.subr.bf16.mxu0 0
        %914 = vmatpush2.bf16.msra.mxu0 0
        %915 = vmatprep.subr.bf16.mxu0 0
        %916 = vmatpush2.bf16.msra.mxu0 0
        %917 = vmatprep.mubr.bf16.mxu0 0
        %918 = vmatmul.mubr.bf16.gmra.mxu0 %v793
        %v919 = vpop.f32.mrf.mxu0
        %v920 = vadd.f32 %v798, %v919
        %v921 = vpop.f32.mrf.mxu0
        %v922 = vadd.f32 %v802, %v921
        %v923 = vpop.f32.mrf.mxu0
        %v924 = vpop.f32.mrf.mxu0
        %925 = vdwg.mxu0
        %v926 = vmax.f32 %v920, 0.0
        %v927 = vxor.u32 %v922, 2147483648
        %v928 = vmul.f32 %v927, 1.442695
        %v929 = vpow.pop %v928
        %v930 = vadd.f32 %v929, 1.0
        %v931 = vrcp.pop %v930
        %v932 = vmul.f32 1.0, %v931
        %v933 = vsub.f32 %v926, %v773
        %v934 = vmul.f32 %v932, %v933
        %v935 = vadd.f32 %v773, %v934
        %v936 = vpack.c.bf16 %v935, %v935
        %v937 = vld [vmem:[#allocation8] sm:$0xf]
        %v938 = vld [vmem:[#allocation8 + $0x4] sm:$0xf]
        %v939 = vld [vmem:[#allocation8 + $0x8] sm:$0xf]
        %v940 = vld [vmem:[#allocation8 + $0xc] sm:$0xf]
        %v941 = vld [vmem:[#allocation8 + $0x10] sm:$0xf]
        %v942 = vld [vmem:[#allocation8 + $0x14] sm:$0xf]
        %v943 = vld [vmem:[#allocation8 + $0x18] sm:$0xf]
        %v944 = vld [vmem:[#allocation8 + $0x1c] sm:$0xf]
        %v945 = vld [vmem:[#allocation8 + $0x20] sm:$0xf]
        %v946 = vld [vmem:[#allocation8 + $0x24] sm:$0xf]
        %v947 = vld [vmem:[#allocation8 + $0x28] sm:$0xf]
        %v948 = vld [vmem:[#allocation8 + $0x2c] sm:$0xf]
        %v949 = vld [vmem:[#allocation8 + $0x30] sm:$0xf]
        %v950 = vld [vmem:[#allocation8 + $0x34] sm:$0xf]
        %v951 = vld [vmem:[#allocation8 + $0x38] sm:$0xf]
        %v952 = vld [vmem:[#allocation8 + $0x3c] sm:$0xf]
        %v953 = vld [vmem:[%s6] sm:$0x1]
        %v955 = vlaneseq
        %v956 = vshrl.u32 %v955, 7
        %v957 = vsub.s32 0, %v956
        %v958 = vrot.slane %v953, %v957
        %v976 = vunpack.c.l.b16 %v937
        %v977 = vunpack.c.l.b16 %v938
        %v978 = vunpack.c.l.b16 %v939
        %v979 = vunpack.c.l.b16 %v940
        %v980 = vunpack.c.l.b16 %v941
        %v981 = vunpack.c.l.b16 %v942
        %v982 = vunpack.c.l.b16 %v943
        %v983 = vunpack.c.l.b16 %v944
        %v984 = vunpack.c.l.b16 %v945
        %v985 = vunpack.c.l.b16 %v946
        %v986 = vunpack.c.l.b16 %v947
        %v987 = vunpack.c.l.b16 %v948
        %v988 = vunpack.c.l.b16 %v949
        %v989 = vunpack.c.l.b16 %v950
        %v990 = vunpack.c.l.b16 %v951
        %v991 = vunpack.c.l.b16 %v952
        %v992 = vpack.c.b16 %v977, %v976
        %v993 = vpack.c.b16 %v979, %v978
        %v994 = vpack.c.b16 %v981, %v980
        %v995 = vpack.c.b16 %v983, %v982
        %v996 = vpack.c.b16 %v985, %v984
        %v997 = vpack.c.b16 %v987, %v986
        %v998 = vpack.c.b16 %v989, %v988
        %v999 = vpack.c.b16 %v991, %v990
        %1008 = vmatprep.subr.bf16.mxu0 0
        %1009 = vmatpush1.bf16.msra.mxu0 %v999
        %1010 = vmatprep.subr.bf16.mxu0 0
        %1011 = vmatpush1.bf16.msra.mxu0 %v998
        %1012 = vmatprep.subr.bf16.mxu0 0
        %1013 = vmatpush1.bf16.msra.mxu0 %v997
        %1014 = vmatprep.subr.bf16.mxu0 0
        %1015 = vmatpush1.bf16.msra.mxu0 %v996
        %1016 = vmatprep.subr.bf16.mxu0 0
        %1017 = vmatpush1.bf16.msra.mxu0 %v995
        %1018 = vmatprep.subr.bf16.mxu0 0
        %1019 = vmatpush1.bf16.msra.mxu0 %v994
        %1020 = vmatprep.subr.bf16.mxu0 0
        %1021 = vmatpush1.bf16.msra.mxu0 %v993
        %1022 = vmatprep.subr.bf16.mxu0 0
        %1023 = vmatpush1.bf16.msra.mxu0 %v992
        %1024 = vmatprep.subr.bf16.mxu0 0
        %1025 = vmatpush2.bf16.msra.mxu0 0
        %1026 = vmatprep.subr.bf16.mxu0 0
        %1027 = vmatpush2.bf16.msra.mxu0 0
        %1028 = vmatprep.subr.bf16.mxu0 0
        %1029 = vmatpush2.bf16.msra.mxu0 0
        %1030 = vmatprep.subr.bf16.mxu0 0
        %1031 = vmatpush2.bf16.msra.mxu0 0
        %1032 = vmatprep.subr.bf16.mxu0 0
        %1033 = vmatpush2.bf16.msra.mxu0 0
        %1034 = vmatprep.subr.bf16.mxu0 0
        %1035 = vmatpush2.bf16.msra.mxu0 0
        %1036 = vmatprep.subr.bf16.mxu0 0
        %1037 = vmatpush2.bf16.msra.mxu0 0
        %1038 = vmatprep.subr.bf16.mxu0 0
        %1039 = vmatpush2.bf16.msra.mxu0 0
        %1040 = vmatprep.mubr.bf16.mxu0 0
        %1041 = vmatmul.mubr.bf16.gmra.mxu0 %v936
        %v1042 = vpop.f32.mrf.mxu0
        %v1043 = vadd.f32 %v958, %v1042
        %v1044 = vpop.f32.mrf.mxu0
        %v1045 = vpop.f32.mrf.mxu0
        %v1046 = vpop.f32.mrf.mxu0
        %1047 = vdwg.mxu0
        %1048 = vst [vmem:[%s337] sm:$0xff] %v1043
        %s1049 = sand.u32 %s186, 1
        %s1050 = scalar_lea.sflag [#allocation4], %s1049
        %s1051 = sand.u32 %s186, 1
        %s1052 = smul.addr %s1051, 8
        %s1053 = scalar_lea.vmem [#allocation10], %s1052
        // Predicated region
        $region65: #{tpu_custom_call.1} parent=47 // pred_check
          %p1054 = pneg %p196
        $region66: #{tpu_custom_call.1} parent=47 // pred_check_branch
          %1056 = sbr.rel (%p1054) target = $region68
        $region67: #{tpu_custom_call.1} parent=47 // pred_region
          %s1058 = ssub.s32 128, 128
          %1059 = vsyncadd %s1050, %s1058
          %s1060 = smul.addr %s26, 128
          %s1061 = scalar_lea.hbm %s7, %s1060
          %s1063 = sshll.u32 %s1053, 4
          %s1064 = int_to_ptr.vmem [resolvable:$true] %s1063
          %1066 = dma.vmem_to_hbm [thread:$0]  %s1064, 128, %s1061, %s1050
        $region68: #{tpu_custom_call.1} parent=47 // pred_fallthru
          _
      $region48: #{tpu_custom_call.1} parent=5 // pred_fallthru
        _
      %p1067 = scmp.le.s32.totalorder 2, %s21
      // Predicated region
      $region69: #{tpu_custom_call.1} parent=5 // pred_check
        %p1068 = pneg %p1067
      $region70: #{tpu_custom_call.1} parent=5 // pred_check_branch
        %1070 = sbr.rel (%p1068) target = $region72
      $region71: #{tpu_custom_call.1} parent=5 // pred_region
        %s1071 = ssub.s32 %s21, 2
        // Predicated region
        $region73: #{tpu_custom_call.1} parent=71 // pred_check
          %p1072 = pneg %p202
        $region74: #{tpu_custom_call.1} parent=71 // pred_check_branch
          %1074 = sbr.rel (%p1072) target = $region76
        $region75: #{tpu_custom_call.1} parent=71 // pred_region
          %s1075 = sand.u32 %s187, 1
          %s1076 = scalar_lea.sflag [#allocation4], %s1075
          %s1077 = sand.u32 %s187, 1
          %s1078 = smul.addr %s1077, 8
          %s1079 = scalar_lea.vmem [#allocation10], %s1078
          %1080 = dma.done %s1076, 128
        $region76: #{tpu_custom_call.1} parent=71 // pred_fallthru
          _
      $region72: #{tpu_custom_call.1} parent=5 // pred_fallthru
        _
    $region6: #{tpu_custom_call.1} parent=1 // loop_footer
      %s25 = sadd.s32 1, %s21
    $region7: #{tpu_custom_call.1} parent=1 // loop_footer_branch
      %20 = sbr.rel target = $region3
    $region8: #{tpu_custom_call.1} parent=1 // loop_exit
      _
    %1081 = vsyncpa [#allocation3], 1
    %s1082 = scalar_lea.sflag [#allocation3], 1
    %1083 = vsyncpa %s1082, 1
    %1084 = vsyncpa [#allocation6], 1
    %1085 = vsyncpa [#allocation9], 1
    %1086 = vsyncpa [#allocation4], 1
    %s1087 = scalar_lea.sflag [#allocation4], 1
    %1088 = vsyncpa %s1087, 1

</llo_original>
